<compile_context>
chip_gen: v6e
topology: v6e:2x2x1
jax: 0.10.0
libtpu: 0.0.40
codegen_flags: <defaults>
</compile_context>

<pallas_src>
import numpy as np
import jax
import jax.numpy as jnp
from jax import lax
from jax.experimental import pallas as pl
from jax.experimental.pallas import tpu as pltpu

PRO_NUM = 16        # number of problems (pro indices = arange(PRO_NUM))
SKILL_NUM = 8       # number of skills
DIFF_FEAT_DIM = 8   # pro_feat.shape[1] - 1
EMBED_DIM = 64
HIDDEN_DIM = 128
NUM_PAIRS = 3       # 3 inputs -> 3 pairwise interactions


def _vmem_spec():
    return pl.BlockSpec(memory_space=pltpu.MemorySpace.VMEM)


# ---------------------------------------------------------------------------
# Static scramble constants reproducing PyTorch's pnn1 view/transpose/reshape
# permutation:  ip[m, r] = ipn[(3m+r) % P, (3m+r) // P]   (ipn = "natural" ips)
# so           ip = sum_p  SEL[p] @ (ipn[:, p:p+1] * RMAP[p])
# ---------------------------------------------------------------------------
def _build_scramble_constants(num_rows: int, num_pairs: int):
    sel = np.zeros((num_pairs, num_rows, num_rows), np.float32)
    rmap = np.zeros((num_pairs, num_rows, num_pairs), np.float32)
    for p in range(num_pairs):
        for b in range(num_rows):
            f = p * num_rows + b            # flat position in ipn.T (row-major)
            m, r = f // num_pairs, f % num_pairs
            sel[p, m, b] = 1.0
            rmap[p, b, r] = 1.0
    return sel, rmap


_SCR_SEL_NP, _SCR_MAP_NP = _build_scramble_constants(PRO_NUM, NUM_PAIRS)


# ---------------------------------------------------------------------------
# The single fused kernel
# ---------------------------------------------------------------------------
def _pegb_fused_kernel(pro_idx_ref, skill_idx_ref,
                       pro_tbl_ref, skill_tbl_ref,
                       diff_feat_ref, diff_w_ref, diff_b_ref,
                       pro_skill_ref, pro_pro_ref, skill_skill_ref,
                       w1_ref, b1_ref, w2_row_ref, b2_ref,
                       target_ref, scr_sel_ref, scr_map_ref,
                       out_ref):
    f32 = jnp.float32

    # --- in-kernel embedding gathers: one-hot @ table on the MXU ------------
    pro_oh = (lax.broadcasted_iota(jnp.int32, (PRO_NUM, PRO_NUM), 1)
              == pro_idx_ref[...]).astype(f32)
    pro_e = jnp.dot(pro_oh, pro_tbl_ref[...], preferred_element_type=f32)

    skill_oh = (lax.broadcasted_iota(jnp.int32, (SKILL_NUM, SKILL_NUM), 1)
                == skill_idx_ref[...]).astype(f32)
    skill_e = jnp.dot(skill_oh, skill_tbl_ref[...], preferred_element_type=f32)

    # --- one Gram matmul for all three relation logit blocks ----------------
    both = jnp.concatenate([pro_e, skill_e], axis=0)           # (P+S, E)
    gram = lax.dot_general(both, both, (((1,), (1,)), ((), ())),
                           preferred_element_type=f32)         # (P+S, P+S)
    pp_logits = gram[:PRO_NUM, :PRO_NUM]
    ps_logits = gram[:PRO_NUM, PRO_NUM:]
    ss_logits = gram[PRO_NUM:, PRO_NUM:]

    def bce_mean(logits, labels, n):
        # stable F.binary_cross_entropy_with_logits, mean folded into 1/n mul
        elem = (jnp.maximum(logits, 0.0) - logits * labels
                + jnp.log(1.0 + jnp.exp(-jnp.abs(logits))))
        return jnp.sum(elem) * (1.0 / n)

    ps_loss = bce_mean(ps_logits, pro_skill_ref[...], PRO_NUM * SKILL_NUM)
    pp_loss = bce_mean(pp_logits, pro_pro_ref[...], PRO_NUM * PRO_NUM)
    ss_loss = bce_mean(ss_logits, skill_skill_ref[...], SKILL_NUM * SKILL_NUM)

    # --- pro_skill-weighted skill averaging (EUP approx reciprocal) ---------
    pro_skill = pro_skill_ref[...]
    inv_cnt = pl.reciprocal(jnp.sum(pro_skill, axis=1, keepdims=True),
                            approx=True)                       # (P, 1)
    skill_avg = jnp.dot(pro_skill, skill_e, preferred_element_type=f32) * inv_cnt

    # --- diff feature Linear -------------------------------------------------
    diff_e = (jnp.dot(diff_feat_ref[...], diff_w_ref[...],
                      preferred_element_type=f32) + diff_b_ref[...])

    # --- pnn1 pair interactions (VPU mul + lane reduce, static scramble) ----
    d_pairs = (jnp.sum(pro_e * skill_avg, axis=-1, keepdims=True),   # pair (0,1)
               jnp.sum(pro_e * diff_e, axis=-1, keepdims=True),      # pair (0,2)
               jnp.sum(skill_avg * diff_e, axis=-1, keepdims=True))  # pair (1,2)
    ip = jnp.zeros((PRO_NUM, NUM_PAIRS), f32)
    for p in range(NUM_PAIRS):
        ip = ip + jnp.dot(scr_sel_ref[p], d_pairs[p] * scr_map_ref[p],
                          preferred_element_type=f32)

    # --- pnn1 MLP: Linear -> ReLU -> Linear(H,1) -----------------------------
    # l = [pro_e | skill_avg | diff_e | ip]; w1 is sliced in-kernel so no
    # lane-axis concatenation is needed.
    h = (jnp.dot(pro_e, w1_ref[0:EMBED_DIM, :], preferred_element_type=f32)
         + jnp.dot(skill_avg, w1_ref[EMBED_DIM:2 * EMBED_DIM, :],
                   preferred_element_type=f32)
         + jnp.dot(diff_e, w1_ref[2 * EMBED_DIM:3 * EMBED_DIM, :],
                   preferred_element_type=f32)
         + jnp.dot(ip, w1_ref[3 * EMBED_DIM:, :], preferred_element_type=f32)
         + b1_ref[...])
    h = jnp.maximum(h, 0.0)
    # TODO(synk): nn.Dropout(p=0.5) omitted — deterministic (eval) path.

    # (P,H) x (H,1) replaced by VPU multiply + lane reduction
    p_out = jnp.sum(h * w2_row_ref[...], axis=-1, keepdims=True) + b2_ref[...]
    resid = p_out - target_ref[...]                            # (P, 1)
    mse = jnp.sum(resid * resid) * (1.0 / PRO_NUM)

    # --- single combined output block: [ps, pp, ss, mse] --------------------
    lane = lax.broadcasted_iota(jnp.int32, (1, 4), 1)
    out_ref[...] = jnp.where(lane == 0, ps_loss,
                             jnp.where(lane == 1, pp_loss,
                                       jnp.where(lane == 2, ss_loss, mse)))


# ---------------------------------------------------------------------------
# Wrapper: one pallas_call, minimal glue (only tiny reshapes of inputs)
# ---------------------------------------------------------------------------
@jax.jit
def pegb_forward(params, pro, diff_feat, pro_skill, pro_pro, skill_idx,
                 skill_skill_adj, target):
    scr_sel = jnp.asarray(_SCR_SEL_NP)
    scr_map = jnp.asarray(_SCR_MAP_NP)

    out = pl.pallas_call(
        _pegb_fused_kernel,
        out_shape=jax.ShapeDtypeStruct((1, 4), jnp.float32),
        in_specs=[_vmem_spec()] * 17,
        out_specs=_vmem_spec(),
        cost_estimate=pl.CostEstimate(flops=1_000_000, transcendentals=1_000,
                                      bytes_accessed=120_000),
    )(pro.reshape(-1, 1).astype(jnp.int32),
      skill_idx.reshape(-1, 1).astype(jnp.int32),
      params['pro_emb'], params['skill_emb'],
      diff_feat, params['diff_w'], params['diff_b'],
      pro_skill, pro_pro, skill_skill_adj,
      params['w1'], params['b1'],
      params['w2'].reshape(1, -1), params['b2'],
      target.reshape(-1, 1),
      scr_sel, scr_map)

    return (out[0, 0], out[0, 1], out[0, 2], out[0, 3])


# ---------------------------------------------------------------------------
# Pure-JAX reference (mirrors the PyTorch module) for correctness check
# ---------------------------------------------------------------------------
def reference_forward(params, pro, diff_feat, pro_skill, pro_pro, skill_idx,
                      skill_skill_adj, target):
    pro_embed = params['pro_emb'][pro]
    skill_embed = params['skill_emb'][skill_idx]
    diff_embed = diff_feat @ params['diff_w'] + params['diff_b']

    def bce(logits, labels):
        return jnp.mean(jnp.maximum(logits, 0.0) - logits * labels
                        + jnp.log1p(jnp.exp(-jnp.abs(logits))))

    ps_loss = bce(pro_embed @ skill_embed.T, pro_skill)
    pp_loss = bce(pro_embed @ pro_embed.T, pro_pro)
    ss_loss = bce(skill_embed @ skill_embed.T, skill_skill_adj)
    skill_avg = pro_skill @ skill_embed / pro_skill.sum(1, keepdims=True)

    E = EMBED_DIM
    xw = jnp.concatenate([pro_embed, skill_avg, diff_embed], axis=1)
    xw3d = xw.reshape(-1, 3, E)
    row = jnp.array([0, 0, 1])
    col = jnp.array([1, 2, 2])
    p_ = jnp.transpose(xw3d[:, row, :], (1, 0, 2)).reshape(-1, 3, E)
    q_ = jnp.transpose(xw3d[:, col, :], (1, 0, 2)).reshape(-1, 3, E)
    ip = jnp.sum(p_ * q_, -1).reshape(-1, 3)
    l = jnp.concatenate([xw, ip], 1)
    h = jax.nn.relu(l @ params['w1'] + params['b1'])
    p = (h @ params['w2'] + params['b2']).reshape(-1)
    mse = jnp.mean((p - target) ** 2)
    return ps_loss, pp_loss, ss_loss, mse


if __name__ == "__main__":
    key = jax.random.PRNGKey(0)
    ks = jax.random.split(key, 10)

    D_IN = 3 * EMBED_DIM + 3
    params = {
        'pro_emb':   jax.random.normal(ks[0], (PRO_NUM, EMBED_DIM), jnp.float32) * 0.1,
        'skill_emb': jax.random.normal(ks[1], (SKILL_NUM, EMBED_DIM), jnp.float32) * 0.1,
        'diff_w':    jax.random.normal(ks[2], (DIFF_FEAT_DIM, EMBED_DIM), jnp.float32) * 0.1,
        'diff_b':    jnp.zeros((1, EMBED_DIM), jnp.float32),
        'w1':        jax.random.normal(ks[3], (D_IN, HIDDEN_DIM), jnp.float32) / np.sqrt(D_IN),
        'b1':        jnp.zeros((1, HIDDEN_DIM), jnp.float32),
        'w2':        jax.random.normal(ks[4], (HIDDEN_DIM, 1), jnp.float32) / np.sqrt(HIDDEN_DIM),
        'b2':        jnp.zeros((1, 1), jnp.float32),
    }

    pro = jnp.arange(PRO_NUM, dtype=jnp.int32)
    skill_idx = jnp.arange(SKILL_NUM, dtype=jnp.int32)   # "skill_skill" lookup arg

    # synthetic pro_feat: last column is the difficulty target, rest is diff_feat
    pro_feat = jax.random.uniform(ks[5], (PRO_NUM, DIFF_FEAT_DIM + 1), jnp.float32)
    diff_feat = pro_feat[:, :-1]
    target = pro_feat[:, -1]

    pro_skill = jax.random.bernoulli(ks[6], 0.3, (PRO_NUM, SKILL_NUM)).astype(jnp.float32)
    pro_skill = pro_skill.at[:, 0].set(1.0)   # guarantee nonzero row sums
    pro_pro = jax.random.bernoulli(ks[7], 0.2, (PRO_NUM, PRO_NUM)).astype(jnp.float32)
    skill_skill_adj = jax.random.bernoulli(ks[8], 0.2, (SKILL_NUM, SKILL_NUM)).astype(jnp.float32)

    out = pegb_forward(params, pro, diff_feat, pro_skill, pro_pro,
                       skill_idx, skill_skill_adj, target)
    out = jax.block_until_ready(out)

    ref = reference_forward(params, pro, diff_feat, pro_skill, pro_pro,
                            skill_idx, skill_skill_adj, target)
    for got, want in zip(out, ref):
        np.testing.assert_allclose(np.asarray(got), np.asarray(want),
                                   rtol=2e-2, atol=2e-3)

    print("KERNEL_OK")
</pallas_src>

<mosaic_0001>
module attributes {stable_mosaic.version = 11 : i64} {
  func.func @_pegb_fused_kernel(%arg0: memref<16x1xi32, #tpu.memory_space<vmem>>, %arg1: memref<8x1xi32, #tpu.memory_space<vmem>>, %arg2: memref<16x64xf32, #tpu.memory_space<vmem>>, %arg3: memref<8x64xf32, #tpu.memory_space<vmem>>, %arg4: memref<16x8xf32, #tpu.memory_space<vmem>>, %arg5: memref<8x64xf32, #tpu.memory_space<vmem>>, %arg6: memref<1x64xf32, #tpu.memory_space<vmem>>, %arg7: memref<16x8xf32, #tpu.memory_space<vmem>>, %arg8: memref<16x16xf32, #tpu.memory_space<vmem>>, %arg9: memref<8x8xf32, #tpu.memory_space<vmem>>, %arg10: memref<195x128xf32, #tpu.memory_space<vmem>>, %arg11: memref<1x128xf32, #tpu.memory_space<vmem>>, %arg12: memref<1x128xf32, #tpu.memory_space<vmem>>, %arg13: memref<1x1xf32, #tpu.memory_space<vmem>>, %arg14: memref<16x1xf32, #tpu.memory_space<vmem>>, %arg15: memref<3x16x16xf32, #tpu.memory_space<vmem>>, %arg16: memref<3x16x3xf32, #tpu.memory_space<vmem>>, %arg17: memref<1x4xf32, #tpu.memory_space<vmem>>) attributes {dimension_semantics = [], scalar_prefetch = 0 : i64, scratch_operands = 0 : i64, tpu.core_type = #tpu.core_type<tc>} {
    %0 = tpu.iota {dimensions = array<i32: 1>} : vector<16x16xi32>
    %c0 = arith.constant 0 : index
    %c0_0 = arith.constant 0 : index
    %1 = vector.load %arg0[%c0, %c0_0] : memref<16x1xi32, #tpu.memory_space<vmem>>, vector<16x1xi32>
    %2 = vector.broadcast %1 : vector<16x1xi32> to vector<16x16xi32>
    %3 = arith.cmpi eq, %0, %2 : vector<16x16xi32>
    %4 = arith.extui %3 : vector<16x16xi1> to vector<16x16xi32>
    %5 = arith.sitofp %4 : vector<16x16xi32> to vector<16x16xf32>
    %c0_1 = arith.constant 0 : index
    %c0_2 = arith.constant 0 : index
    %6 = vector.load %arg2[%c0_1, %c0_2] : memref<16x64xf32, #tpu.memory_space<vmem>>, vector<16x64xf32>
    %cst = arith.constant dense<0.000000e+00> : vector<16x64xf32>
    %7 = tpu.matmul %5, %6, %cst {dimension_numbers = #tpu.dot_dimension_numbers<[1], [0], [0], [1], [0, 0, 1, 1], [], []>} : vector<16x16xf32>, vector<16x64xf32>, vector<16x64xf32> -> vector<16x64xf32>
    %8 = tpu.iota {dimensions = array<i32: 1>} : vector<8x8xi32>
    %c0_3 = arith.constant 0 : index
    %c0_4 = arith.constant 0 : index
    %9 = vector.load %arg1[%c0_3, %c0_4] : memref<8x1xi32, #tpu.memory_space<vmem>>, vector<8x1xi32>
    %10 = vector.broadcast %9 : vector<8x1xi32> to vector<8x8xi32>
    %11 = arith.cmpi eq, %8, %10 : vector<8x8xi32>
    %12 = arith.extui %11 : vector<8x8xi1> to vector<8x8xi32>
    %13 = arith.sitofp %12 : vector<8x8xi32> to vector<8x8xf32>
    %c0_5 = arith.constant 0 : index
    %c0_6 = arith.constant 0 : index
    %14 = vector.load %arg3[%c0_5, %c0_6] : memref<8x64xf32, #tpu.memory_space<vmem>>, vector<8x64xf32>
    %cst_7 = arith.constant dense<0.000000e+00> : vector<8x64xf32>
    %15 = tpu.matmul %13, %14, %cst_7 {dimension_numbers = #tpu.dot_dimension_numbers<[1], [0], [0], [1], [0, 0, 1, 1], [], []>} : vector<8x8xf32>, vector<8x64xf32>, vector<8x64xf32> -> vector<8x64xf32>
    %16 = tpu.concatenate %7, %15 in 0 : vector<16x64xf32>, vector<8x64xf32> -> vector<24x64xf32>
    %cst_8 = arith.constant dense<0.000000e+00> : vector<24x24xf32>
    %17 = tpu.matmul %16, %16, %cst_8 {dimension_numbers = #tpu.dot_dimension_numbers<[1], [1], [0], [0], [0, 0, 1, 0], [], []>} : vector<24x64xf32>, vector<24x64xf32>, vector<24x24xf32> -> vector<24x24xf32>
    %18 = vector.extract_strided_slice %17 {offsets = [0, 0], sizes = [16, 16], strides = [1, 1]} : vector<24x24xf32> to vector<16x16xf32>
    %19 = vector.extract_strided_slice %17 {offsets = [0, 16], sizes = [16, 8], strides = [1, 1]} : vector<24x24xf32> to vector<16x8xf32>
    %20 = vector.extract_strided_slice %17 {offsets = [16, 16], sizes = [8, 8], strides = [1, 1]} : vector<24x24xf32> to vector<8x8xf32>
    %c0_9 = arith.constant 0 : index
    %c0_10 = arith.constant 0 : index
    %21 = vector.load %arg7[%c0_9, %c0_10] : memref<16x8xf32, #tpu.memory_space<vmem>>, vector<16x8xf32>
    %cst_11 = arith.constant 0.000000e+00 : f32
    %22 = vector.broadcast %cst_11 : f32 to vector<16x8xf32>
    %23 = arith.maximumf %19, %22 : vector<16x8xf32>
    %24 = arith.mulf %19, %21 : vector<16x8xf32>
    %25 = arith.subf %23, %24 : vector<16x8xf32>
    %26 = math.absf %19 : vector<16x8xf32>
    %cst_12 = arith.constant 0.000000e+00 : f32
    %27 = vector.broadcast %cst_12 : f32 to vector<16x8xf32>
    %28 = arith.subf %27, %26 : vector<16x8xf32>
    %29 = math.exp %28 : vector<16x8xf32>
    %cst_13 = arith.constant 1.000000e+00 : f32
    %30 = vector.broadcast %cst_13 : f32 to vector<16x8xf32>
    %31 = arith.addf %30, %29 : vector<16x8xf32>
    %32 = math.log %31 : vector<16x8xf32>
    %33 = arith.addf %25, %32 : vector<16x8xf32>
    %34 = vector.shape_cast %33 : vector<16x8xf32> to vector<1x16x8xf32>
    %cst_14 = arith.constant dense<0.000000e+00> : vector<1xf32>
    %35 = vector.multi_reduction <add>, %34, %cst_14 [1, 2] : vector<1x16x8xf32> to vector<1xf32>
    %36 = vector.shape_cast %35 : vector<1xf32> to vector<1x1x1xf32>
    %37 = vector.extract %36[0, 0, 0] : f32 from vector<1x1x1xf32>
    %cst_15 = arith.constant 7.812500e-03 : f32
    %38 = arith.mulf %37, %cst_15 : f32
    %c0_16 = arith.constant 0 : index
    %c0_17 = arith.constant 0 : index
    %39 = vector.load %arg8[%c0_16, %c0_17] : memref<16x16xf32, #tpu.memory_space<vmem>>, vector<16x16xf32>
    %cst_18 = arith.constant 0.000000e+00 : f32
    %40 = vector.broadcast %cst_18 : f32 to vector<16x16xf32>
    %41 = arith.maximumf %18, %40 : vector<16x16xf32>
    %42 = arith.mulf %18, %39 : vector<16x16xf32>
    %43 = arith.subf %41, %42 : vector<16x16xf32>
    %44 = math.absf %18 : vector<16x16xf32>
    %cst_19 = arith.constant 0.000000e+00 : f32
    %45 = vector.broadcast %cst_19 : f32 to vector<16x16xf32>
    %46 = arith.subf %45, %44 : vector<16x16xf32>
    %47 = math.exp %46 : vector<16x16xf32>
    %cst_20 = arith.constant 1.000000e+00 : f32
    %48 = vector.broadcast %cst_20 : f32 to vector<16x16xf32>
    %49 = arith.addf %48, %47 : vector<16x16xf32>
    %50 = math.log %49 : vector<16x16xf32>
    %51 = arith.addf %43, %50 : vector<16x16xf32>
    %52 = vector.shape_cast %51 : vector<16x16xf32> to vector<1x16x16xf32>
    %cst_21 = arith.constant dense<0.000000e+00> : vector<1xf32>
    %53 = vector.multi_reduction <add>, %52, %cst_21 [1, 2] : vector<1x16x16xf32> to vector<1xf32>
    %54 = vector.shape_cast %53 : vector<1xf32> to vector<1x1x1xf32>
    %55 = vector.extract %54[0, 0, 0] : f32 from vector<1x1x1xf32>
    %cst_22 = arith.constant 3.906250e-03 : f32
    %56 = arith.mulf %55, %cst_22 : f32
    %c0_23 = arith.constant 0 : index
    %c0_24 = arith.constant 0 : index
    %57 = vector.load %arg9[%c0_23, %c0_24] : memref<8x8xf32, #tpu.memory_space<vmem>>, vector<8x8xf32>
    %cst_25 = arith.constant 0.000000e+00 : f32
    %58 = vector.broadcast %cst_25 : f32 to vector<8x8xf32>
    %59 = arith.maximumf %20, %58 : vector<8x8xf32>
    %60 = arith.mulf %20, %57 : vector<8x8xf32>
    %61 = arith.subf %59, %60 : vector<8x8xf32>
    %62 = math.absf %20 : vector<8x8xf32>
    %cst_26 = arith.constant 0.000000e+00 : f32
    %63 = vector.broadcast %cst_26 : f32 to vector<8x8xf32>
    %64 = arith.subf %63, %62 : vector<8x8xf32>
    %65 = math.exp %64 : vector<8x8xf32>
    %cst_27 = arith.constant 1.000000e+00 : f32
    %66 = vector.broadcast %cst_27 : f32 to vector<8x8xf32>
    %67 = arith.addf %66, %65 : vector<8x8xf32>
    %68 = math.log %67 : vector<8x8xf32>
    %69 = arith.addf %61, %68 : vector<8x8xf32>
    %70 = vector.shape_cast %69 : vector<8x8xf32> to vector<1x8x8xf32>
    %cst_28 = arith.constant dense<0.000000e+00> : vector<1xf32>
    %71 = vector.multi_reduction <add>, %70, %cst_28 [1, 2] : vector<1x8x8xf32> to vector<1xf32>
    %72 = vector.shape_cast %71 : vector<1xf32> to vector<1x1x1xf32>
    %73 = vector.extract %72[0, 0, 0] : f32 from vector<1x1x1xf32>
    %cst_29 = arith.constant 1.562500e-02 : f32
    %74 = arith.mulf %73, %cst_29 : f32
    %c0_30 = arith.constant 0 : index
    %c0_31 = arith.constant 0 : index
    %75 = vector.load %arg7[%c0_30, %c0_31] : memref<16x8xf32, #tpu.memory_space<vmem>>, vector<16x8xf32>
    %cst_32 = arith.constant dense<0.000000e+00> : vector<16xf32>
    %76 = vector.multi_reduction <add>, %75, %cst_32 [1] : vector<16x8xf32> to vector<16xf32>
    %77 = vector.shape_cast %76 : vector<16xf32> to vector<16x1xf32>
    %78 = tpu.reciprocal %77 {approx = true} : vector<16x1xf32> -> vector<16x1xf32>
    %cst_33 = arith.constant dense<0.000000e+00> : vector<16x64xf32>
    %79 = tpu.matmul %75, %15, %cst_33 {dimension_numbers = #tpu.dot_dimension_numbers<[1], [0], [0], [1], [0, 0, 1, 1], [], []>} : vector<16x8xf32>, vector<8x64xf32>, vector<16x64xf32> -> vector<16x64xf32>
    %80 = vector.broadcast %78 : vector<16x1xf32> to vector<16x64xf32>
    %81 = arith.mulf %79, %80 : vector<16x64xf32>
    %c0_34 = arith.constant 0 : index
    %c0_35 = arith.constant 0 : index
    %82 = vector.load %arg4[%c0_34, %c0_35] : memref<16x8xf32, #tpu.memory_space<vmem>>, vector<16x8xf32>
    %c0_36 = arith.constant 0 : index
    %c0_37 = arith.constant 0 : index
    %83 = vector.load %arg5[%c0_36, %c0_37] : memref<8x64xf32, #tpu.memory_space<vmem>>, vector<8x64xf32>
    %cst_38 = arith.constant dense<0.000000e+00> : vector<16x64xf32>
    %84 = tpu.matmul %82, %83, %cst_38 {dimension_numbers = #tpu.dot_dimension_numbers<[1], [0], [0], [1], [0, 0, 1, 1], [], []>} : vector<16x8xf32>, vector<8x64xf32>, vector<16x64xf32> -> vector<16x64xf32>
    %c0_39 = arith.constant 0 : index
    %c0_40 = arith.constant 0 : index
    %85 = vector.load %arg6[%c0_39, %c0_40] : memref<1x64xf32, #tpu.memory_space<vmem>>, vector<1x64xf32>
    %86 = vector.broadcast %85 : vector<1x64xf32> to vector<16x64xf32>
    %87 = arith.addf %84, %86 : vector<16x64xf32>
    %88 = arith.mulf %7, %81 : vector<16x64xf32>
    %cst_41 = arith.constant dense<0.000000e+00> : vector<16xf32>
    %89 = vector.multi_reduction <add>, %88, %cst_41 [1] : vector<16x64xf32> to vector<16xf32>
    %90 = vector.shape_cast %89 : vector<16xf32> to vector<16x1xf32>
    %91 = arith.mulf %7, %87 : vector<16x64xf32>
    %cst_42 = arith.constant dense<0.000000e+00> : vector<16xf32>
    %92 = vector.multi_reduction <add>, %91, %cst_42 [1] : vector<16x64xf32> to vector<16xf32>
    %93 = vector.shape_cast %92 : vector<16xf32> to vector<16x1xf32>
    %94 = arith.mulf %81, %87 : vector<16x64xf32>
    %cst_43 = arith.constant dense<0.000000e+00> : vector<16xf32>
    %95 = vector.multi_reduction <add>, %94, %cst_43 [1] : vector<16x64xf32> to vector<16xf32>
    %96 = vector.shape_cast %95 : vector<16xf32> to vector<16x1xf32>
    %cst_44 = arith.constant 0.000000e+00 : f32
    %97 = vector.broadcast %cst_44 : f32 to vector<16x3xf32>
    %c0_45 = arith.constant 0 : index
    %c0_46 = arith.constant 0 : index
    %c0_47 = arith.constant 0 : index
    %98 = vector.load %arg15[%c0_45, %c0_46, %c0_47] : memref<3x16x16xf32, #tpu.memory_space<vmem>>, vector<1x16x16xf32>
    %99 = vector.shape_cast %98 : vector<1x16x16xf32> to vector<16x16xf32>
    %c0_48 = arith.constant 0 : index
    %c0_49 = arith.constant 0 : index
    %c0_50 = arith.constant 0 : index
    %100 = vector.load %arg16[%c0_48, %c0_49, %c0_50] : memref<3x16x3xf32, #tpu.memory_space<vmem>>, vector<1x16x3xf32>
    %101 = vector.shape_cast %100 : vector<1x16x3xf32> to vector<16x3xf32>
    %102 = vector.broadcast %90 : vector<16x1xf32> to vector<16x3xf32>
    %103 = arith.mulf %102, %101 : vector<16x3xf32>
    %cst_51 = arith.constant dense<0.000000e+00> : vector<16x3xf32>
    %104 = tpu.matmul %99, %103, %cst_51 {dimension_numbers = #tpu.dot_dimension_numbers<[1], [0], [0], [1], [0, 0, 1, 1], [], []>} : vector<16x16xf32>, vector<16x3xf32>, vector<16x3xf32> -> vector<16x3xf32>
    %105 = arith.addf %97, %104 : vector<16x3xf32>
    %c1 = arith.constant 1 : index
    %c0_52 = arith.constant 0 : index
    %c0_53 = arith.constant 0 : index
    %106 = vector.load %arg15[%c1, %c0_52, %c0_53] : memref<3x16x16xf32, #tpu.memory_space<vmem>>, vector<1x16x16xf32>
    %107 = vector.shape_cast %106 : vector<1x16x16xf32> to vector<16x16xf32>
    %c1_54 = arith.constant 1 : index
    %c0_55 = arith.constant 0 : index
    %c0_56 = arith.constant 0 : index
    %108 = vector.load %arg16[%c1_54, %c0_55, %c0_56] : memref<3x16x3xf32, #tpu.memory_space<vmem>>, vector<1x16x3xf32>
    %109 = vector.shape_cast %108 : vector<1x16x3xf32> to vector<16x3xf32>
    %110 = vector.broadcast %93 : vector<16x1xf32> to vector<16x3xf32>
    %111 = arith.mulf %110, %109 : vector<16x3xf32>
    %cst_57 = arith.constant dense<0.000000e+00> : vector<16x3xf32>
    %112 = tpu.matmul %107, %111, %cst_57 {dimension_numbers = #tpu.dot_dimension_numbers<[1], [0], [0], [1], [0, 0, 1, 1], [], []>} : vector<16x16xf32>, vector<16x3xf32>, vector<16x3xf32> -> vector<16x3xf32>
    %113 = arith.addf %105, %112 : vector<16x3xf32>
    %c2 = arith.constant 2 : index
    %c0_58 = arith.constant 0 : index
    %c0_59 = arith.constant 0 : index
    %114 = vector.load %arg15[%c2, %c0_58, %c0_59] : memref<3x16x16xf32, #tpu.memory_space<vmem>>, vector<1x16x16xf32>
    %115 = vector.shape_cast %114 : vector<1x16x16xf32> to vector<16x16xf32>
    %c2_60 = arith.constant 2 : index
    %c0_61 = arith.constant 0 : index
    %c0_62 = arith.constant 0 : index
    %116 = vector.load %arg16[%c2_60, %c0_61, %c0_62] : memref<3x16x3xf32, #tpu.memory_space<vmem>>, vector<1x16x3xf32>
    %117 = vector.shape_cast %116 : vector<1x16x3xf32> to vector<16x3xf32>
    %118 = vector.broadcast %96 : vector<16x1xf32> to vector<16x3xf32>
    %119 = arith.mulf %118, %117 : vector<16x3xf32>
    %cst_63 = arith.constant dense<0.000000e+00> : vector<16x3xf32>
    %120 = tpu.matmul %115, %119, %cst_63 {dimension_numbers = #tpu.dot_dimension_numbers<[1], [0], [0], [1], [0, 0, 1, 1], [], []>} : vector<16x16xf32>, vector<16x3xf32>, vector<16x3xf32> -> vector<16x3xf32>
    %121 = arith.addf %113, %120 : vector<16x3xf32>
    %c0_64 = arith.constant 0 : index
    %c0_65 = arith.constant 0 : index
    %122 = vector.load %arg10[%c0_64, %c0_65] : memref<195x128xf32, #tpu.memory_space<vmem>>, vector<64x128xf32>
    %cst_66 = arith.constant dense<0.000000e+00> : vector<16x128xf32>
    %123 = tpu.matmul %7, %122, %cst_66 {dimension_numbers = #tpu.dot_dimension_numbers<[1], [0], [0], [1], [0, 0, 1, 1], [], []>} : vector<16x64xf32>, vector<64x128xf32>, vector<16x128xf32> -> vector<16x128xf32>
    %c64 = arith.constant 64 : index
    %c0_67 = arith.constant 0 : index
    %124 = vector.load %arg10[%c64, %c0_67] : memref<195x128xf32, #tpu.memory_space<vmem>>, vector<64x128xf32>
    %cst_68 = arith.constant dense<0.000000e+00> : vector<16x128xf32>
    %125 = tpu.matmul %81, %124, %cst_68 {dimension_numbers = #tpu.dot_dimension_numbers<[1], [0], [0], [1], [0, 0, 1, 1], [], []>} : vector<16x64xf32>, vector<64x128xf32>, vector<16x128xf32> -> vector<16x128xf32>
    %126 = arith.addf %123, %125 : vector<16x128xf32>
    %c128 = arith.constant 128 : index
    %c0_69 = arith.constant 0 : index
    %127 = vector.load %arg10[%c128, %c0_69] : memref<195x128xf32, #tpu.memory_space<vmem>>, vector<64x128xf32>
    %cst_70 = arith.constant dense<0.000000e+00> : vector<16x128xf32>
    %128 = tpu.matmul %87, %127, %cst_70 {dimension_numbers = #tpu.dot_dimension_numbers<[1], [0], [0], [1], [0, 0, 1, 1], [], []>} : vector<16x64xf32>, vector<64x128xf32>, vector<16x128xf32> -> vector<16x128xf32>
    %129 = arith.addf %126, %128 : vector<16x128xf32>
    %c192 = arith.constant 192 : index
    %c0_71 = arith.constant 0 : index
    %130 = vector.load %arg10[%c192, %c0_71] : memref<195x128xf32, #tpu.memory_space<vmem>>, vector<3x128xf32>
    %cst_72 = arith.constant dense<0.000000e+00> : vector<16x128xf32>
    %131 = tpu.matmul %121, %130, %cst_72 {dimension_numbers = #tpu.dot_dimension_numbers<[1], [0], [0], [1], [0, 0, 1, 1], [], []>} : vector<16x3xf32>, vector<3x128xf32>, vector<16x128xf32> -> vector<16x128xf32>
    %132 = arith.addf %129, %131 : vector<16x128xf32>
    %c0_73 = arith.constant 0 : index
    %c0_74 = arith.constant 0 : index
    %133 = vector.load %arg11[%c0_73, %c0_74] : memref<1x128xf32, #tpu.memory_space<vmem>>, vector<1x128xf32>
    %134 = vector.broadcast %133 : vector<1x128xf32> to vector<16x128xf32>
    %135 = arith.addf %132, %134 : vector<16x128xf32>
    %cst_75 = arith.constant 0.000000e+00 : f32
    %136 = vector.broadcast %cst_75 : f32 to vector<16x128xf32>
    %137 = arith.maximumf %135, %136 : vector<16x128xf32>
    %c0_76 = arith.constant 0 : index
    %c0_77 = arith.constant 0 : index
    %138 = vector.load %arg12[%c0_76, %c0_77] : memref<1x128xf32, #tpu.memory_space<vmem>>, vector<1x128xf32>
    %139 = vector.broadcast %138 : vector<1x128xf32> to vector<16x128xf32>
    %140 = arith.mulf %137, %139 : vector<16x128xf32>
    %cst_78 = arith.constant dense<0.000000e+00> : vector<16xf32>
    %141 = vector.multi_reduction <add>, %140, %cst_78 [1] : vector<16x128xf32> to vector<16xf32>
    %142 = vector.shape_cast %141 : vector<16xf32> to vector<16x1xf32>
    %c0_79 = arith.constant 0 : index
    %c0_80 = arith.constant 0 : index
    %143 = vector.load %arg13[%c0_79, %c0_80] : memref<1x1xf32, #tpu.memory_space<vmem>>, vector<1x1xf32>
    %144 = vector.broadcast %143 : vector<1x1xf32> to vector<16x1xf32>
    %145 = arith.addf %142, %144 : vector<16x1xf32>
    %c0_81 = arith.constant 0 : index
    %c0_82 = arith.constant 0 : index
    %146 = vector.load %arg14[%c0_81, %c0_82] : memref<16x1xf32, #tpu.memory_space<vmem>>, vector<16x1xf32>
    %147 = arith.subf %145, %146 : vector<16x1xf32>
    %148 = arith.mulf %147, %147 : vector<16x1xf32>
    %149 = vector.shape_cast %148 : vector<16x1xf32> to vector<1x16x1xf32>
    %cst_83 = arith.constant dense<0.000000e+00> : vector<1xf32>
    %150 = vector.multi_reduction <add>, %149, %cst_83 [1, 2] : vector<1x16x1xf32> to vector<1xf32>
    %151 = vector.shape_cast %150 : vector<1xf32> to vector<1x1x1xf32>
    %152 = vector.extract %151[0, 0, 0] : f32 from vector<1x1x1xf32>
    %cst_84 = arith.constant 6.250000e-02 : f32
    %153 = arith.mulf %152, %cst_84 : f32
    %154 = tpu.iota {dimensions = array<i32: 1>} : vector<1x4xi32>
    %c0_i32 = arith.constant 0 : i32
    %155 = vector.broadcast %c0_i32 : i32 to vector<1x4xi32>
    %156 = arith.cmpi eq, %154, %155 : vector<1x4xi32>
    %c1_i32 = arith.constant 1 : i32
    %157 = vector.broadcast %c1_i32 : i32 to vector<1x4xi32>
    %158 = arith.cmpi eq, %154, %157 : vector<1x4xi32>
    %c2_i32 = arith.constant 2 : i32
    %159 = vector.broadcast %c2_i32 : i32 to vector<1x4xi32>
    %160 = arith.cmpi eq, %154, %159 : vector<1x4xi32>
    %161 = vector.broadcast %74 : f32 to vector<1x4xf32>
    %162 = vector.broadcast %153 : f32 to vector<1x4xf32>
    %163 = arith.select %160, %161, %162 : vector<1x4xi1>, vector<1x4xf32>
    %164 = vector.broadcast %56 : f32 to vector<1x4xf32>
    %165 = arith.select %158, %164, %163 : vector<1x4xi1>, vector<1x4xf32>
    %166 = vector.broadcast %38 : f32 to vector<1x4xf32>
    %167 = arith.select %156, %166, %165 : vector<1x4xi1>, vector<1x4xf32>
    %c0_85 = arith.constant 0 : index
    %c0_86 = arith.constant 0 : index
    %168 = vector.load %arg17[%c0_85, %c0_86] : memref<1x4xf32, #tpu.memory_space<vmem>>, vector<1x4xf32>
    tpu.vector_store %arg17[%c0_85, %c0_86], %167 {strides = array<i32>} : memref<1x4xf32, #tpu.memory_space<vmem>>, vector<1x4xf32>,
    return
  }
}

</mosaic_0001>

<llo_original>
// kernel: pegb_forward.1
$region0: #{pegb_forward.1}
  #allocation0 [shape = 'u32[]', space=smem, size = 0x4, offset = 0x4, fixed_abs, tag = 'smem constant byte address 0x4 - core index']
  #allocation1 [shape = 'u32[144,128]{1,0:T(1,128)}', space=vmem, size = 0x12000, scoped, tag = 'internal scratch']
  #allocation2 [shape = 'f32[1,1]{1,0:T(1,128)S(1)}', space=vmem, size = 0x200, scoped, tag = 'scoped memory for pegb_forward.1']
  %s0 = inlined_call_operand.vmem [shape: s32[16,1], index: 0, kind: input, shape index: {}]
  %s1 = inlined_call_operand.vmem [shape: s32[8,1], index: 1, kind: input, shape index: {}]
  %s2 = inlined_call_operand.hbm [shape: f32[16,64], index: 2, kind: input, shape index: {}]
  %s3 = inlined_call_operand.hbm [shape: f32[8,64], index: 3, kind: input, shape index: {}]
  %s4 = inlined_call_operand.vmem [shape: f32[16,8], index: 4, kind: input, shape index: {}]
  %s5 = inlined_call_operand.hbm [shape: f32[8,64], index: 5, kind: input, shape index: {}]
  %s6 = inlined_call_operand.hbm [shape: f32[1,64], index: 6, kind: input, shape index: {}]
  %s7 = inlined_call_operand.vmem [shape: f32[16,8], index: 7, kind: input, shape index: {}]
  %s8 = inlined_call_operand.vmem [shape: f32[16,16], index: 8, kind: input, shape index: {}]
  %s9 = inlined_call_operand.vmem [shape: f32[8,8], index: 9, kind: input, shape index: {}]
  %s10 = inlined_call_operand.hbm [shape: f32[195,128], index: 10, kind: input, shape index: {}]
  %s11 = inlined_call_operand.hbm [shape: f32[1,128], index: 11, kind: input, shape index: {}]
  %s12 = inlined_call_operand.hbm [shape: f32[1,128], index: 12, kind: input, shape index: {}]
  %s13 = inlined_call_operand.<no memory space> [shape: f32[1,1], index: 13, kind: input, shape index: {}]
  %s14 = inlined_call_operand.vmem [shape: f32[16,1], index: 14, kind: input, shape index: {}]
  %s15 = inlined_call_operand.vmem [shape: f32[3,16,16], index: 15, kind: input, shape index: {}]
  %s16 = inlined_call_operand.vmem [shape: f32[3,16,3], index: 16, kind: input, shape index: {}]
  %s17 = inlined_call_operand.vmem [shape: f32[1,4], index: 17, kind: output, shape index: {}]
  %s18 = sld [smem:[#allocation0]]
  $region106: #{pegb_forward.1} parent=0
    _
  %s20 = ssub.s32 1, %s18
  %s21 = scalar_select 0, %s20, %s18
  %v22 = vstv %s13
  %23 = vst [vmem:[#allocation2] sm:$0x1] %v22
  $region1: #{pegb_forward.1} parent=0
    #allocation3 [shape = 'u8[8192]{0}', space=vmem, size = 0x2000, scoped, tag = 'input window, operand 2, single buffered']
    #allocation4 [shape = 's32[1]{0}', space=sflag, size = 0x4, scoped, tag = 'scoped memory for pegb_forward.1']
    #allocation5 [shape = 'u8[4096]{0}', space=vmem, size = 0x1000, scoped, tag = 'input window, operand 3, single buffered']
    #allocation6 [shape = 's32[1]{0}', space=sflag, size = 0x4, scoped, tag = 'scoped memory for pegb_forward.1']
    #allocation7 [shape = 'u8[4096]{0}', space=vmem, size = 0x1000, scoped, tag = 'input window, operand 5, single buffered']
    #allocation8 [shape = 'u8[512]{0}', space=vmem, size = 0x400, scoped, tag = 'input window, operand 6, single buffered']
    #allocation9 [shape = 's32[1]{0}', space=sflag, size = 0x4, scoped, tag = 'scoped memory for pegb_forward.1']
    #allocation10 [shape = 'u8[102400]{0}', space=vmem, size = 0x19000, scoped, tag = 'input window, operand 10, single buffered']
    #allocation11 [shape = 'u8[512]{0}', space=vmem, size = 0x400, scoped, tag = 'input window, operand 11, single buffered']
    #allocation12 [shape = 's32[1]{0}', space=sflag, size = 0x4, scoped, tag = 'scoped memory for pegb_forward.1']
    #allocation13 [shape = 'u8[512]{0}', space=vmem, size = 0x400, scoped, tag = 'input window, operand 12, single buffered']
    %24 = vsyncpa [#allocation4], 0
    %25 = vsyncpa [#allocation6], 0
    %26 = vsyncpa [#allocation9], 0
    %27 = vsyncpa [#allocation12], 0
    // Predicated region
    $region2: #{pegb_forward.1} parent=1 // pred_check
      _
    $region3: #{pegb_forward.1} parent=1 // pred_check_branch
      %29 = sbr.rel (0) target = $region5
    $region4: #{pegb_forward.1} parent=1 // pred_region
      _
    $region5: #{pegb_forward.1} parent=1 // pred_fallthru
      _
    // Predicated region
    $region6: #{pegb_forward.1} parent=1 // pred_check
      _
    $region7: #{pegb_forward.1} parent=1 // pred_check_branch
      %31 = sbr.rel (0) target = $region9
    $region8: #{pegb_forward.1} parent=1 // pred_region
      _
    $region9: #{pegb_forward.1} parent=1 // pred_fallthru
      _
    // Predicated region
    $region10: #{pegb_forward.1} parent=1 // pred_check
      _
    $region11: #{pegb_forward.1} parent=1 // pred_check_branch
      %33 = sbr.rel (0) target = $region13
    $region12: #{pegb_forward.1} parent=1 // pred_region
      %s35 = ssub.s32 256, 256
      %36 = vsyncadd [#allocation4], %s35
      %s37 = sshll.u32 [#allocation3], 4
      %s38 = int_to_ptr.vmem [resolvable:$true] %s37
      %43 = dma.hbm_to_vmem [thread:$0]  %s2, 256, %s38, [#allocation4], 128, 128, 8
    $region13: #{pegb_forward.1} parent=1 // pred_fallthru
      _
    // Predicated region
    $region14: #{pegb_forward.1} parent=1 // pred_check
      _
    $region15: #{pegb_forward.1} parent=1 // pred_check_branch
      %45 = sbr.rel (0) target = $region17
    $region16: #{pegb_forward.1} parent=1 // pred_region
      %s47 = ssub.s32 128, 128
      %48 = vsyncadd [#allocation6], %s47
      %s50 = sshll.u32 [#allocation5], 4
      %s51 = int_to_ptr.vmem [resolvable:$true] %s50
      %53 = dma.hbm_to_vmem [thread:$0]  %s3, 128, %s51, [#allocation6]
    $region17: #{pegb_forward.1} parent=1 // pred_fallthru
      _
    // Predicated region
    $region18: #{pegb_forward.1} parent=1 // pred_check
      _
    $region19: #{pegb_forward.1} parent=1 // pred_check_branch
      %55 = sbr.rel (0) target = $region21
    $region20: #{pegb_forward.1} parent=1 // pred_region
      _
    $region21: #{pegb_forward.1} parent=1 // pred_fallthru
      _
    // Predicated region
    $region22: #{pegb_forward.1} parent=1 // pred_check
      _
    $region23: #{pegb_forward.1} parent=1 // pred_check_branch
      %57 = sbr.rel (0) target = $region25
    $region24: #{pegb_forward.1} parent=1 // pred_region
      %s59 = ssub.s32 128, 128
      %60 = vsyncadd [#allocation6], %s59
      %s62 = sshll.u32 [#allocation7], 4
      %s63 = int_to_ptr.vmem [resolvable:$true] %s62
      %65 = dma.hbm_to_vmem [thread:$0]  %s5, 128, %s63, [#allocation6]
    $region25: #{pegb_forward.1} parent=1 // pred_fallthru
      _
    // Predicated region
    $region26: #{pegb_forward.1} parent=1 // pred_check
      _
    $region27: #{pegb_forward.1} parent=1 // pred_check_branch
      %67 = sbr.rel (0) target = $region29
    $region28: #{pegb_forward.1} parent=1 // pred_region
      %s69 = ssub.s32 16, 16
      %70 = vsyncadd [#allocation9], %s69
      %s72 = sshll.u32 [#allocation8], 4
      %s73 = int_to_ptr.vmem [resolvable:$true] %s72
      %75 = dma.hbm_to_vmem [thread:$0]  %s6, 16, %s73, [#allocation9]
    $region29: #{pegb_forward.1} parent=1 // pred_fallthru
      _
    // Predicated region
    $region30: #{pegb_forward.1} parent=1 // pred_check
      _
    $region31: #{pegb_forward.1} parent=1 // pred_check_branch
      %77 = sbr.rel (0) target = $region33
    $region32: #{pegb_forward.1} parent=1 // pred_region
      _
    $region33: #{pegb_forward.1} parent=1 // pred_fallthru
      _
    // Predicated region
    $region34: #{pegb_forward.1} parent=1 // pred_check
      _
    $region35: #{pegb_forward.1} parent=1 // pred_check_branch
      %79 = sbr.rel (0) target = $region37
    $region36: #{pegb_forward.1} parent=1 // pred_region
      _
    $region37: #{pegb_forward.1} parent=1 // pred_fallthru
      _
    // Predicated region
    $region38: #{pegb_forward.1} parent=1 // pred_check
      _
    $region39: #{pegb_forward.1} parent=1 // pred_check_branch
      %81 = sbr.rel (0) target = $region41
    $region40: #{pegb_forward.1} parent=1 // pred_region
      _
    $region41: #{pegb_forward.1} parent=1 // pred_fallthru
      _
    // Predicated region
    $region42: #{pegb_forward.1} parent=1 // pred_check
      _
    $region43: #{pegb_forward.1} parent=1 // pred_check_branch
      %83 = sbr.rel (0) target = $region45
    $region44: #{pegb_forward.1} parent=1 // pred_region
      %s85 = ssub.s32 3200, 3200
      %86 = vsyncadd [#allocation9], %s85
      %s87 = sshll.u32 [#allocation10], 4
      %s88 = int_to_ptr.vmem [resolvable:$true] %s87
      %93 = dma.hbm_to_vmem [thread:$0]  %s10, 3200, %s88, [#allocation9], 128, 128, 8
    $region45: #{pegb_forward.1} parent=1 // pred_fallthru
      _
    // Predicated region
    $region46: #{pegb_forward.1} parent=1 // pred_check
      _
    $region47: #{pegb_forward.1} parent=1 // pred_check_branch
      %95 = sbr.rel (0) target = $region49
    $region48: #{pegb_forward.1} parent=1 // pred_region
      %s97 = ssub.s32 16, 16
      %98 = vsyncadd [#allocation12], %s97
      %s100 = sshll.u32 [#allocation11], 4
      %s101 = int_to_ptr.vmem [resolvable:$true] %s100
      %103 = dma.hbm_to_vmem [thread:$0]  %s11, 16, %s101, [#allocation12]
    $region49: #{pegb_forward.1} parent=1 // pred_fallthru
      _
    // Predicated region
    $region50: #{pegb_forward.1} parent=1 // pred_check
      _
    $region51: #{pegb_forward.1} parent=1 // pred_check_branch
      %105 = sbr.rel (0) target = $region53
    $region52: #{pegb_forward.1} parent=1 // pred_region
      %s107 = ssub.s32 16, 16
      %108 = vsyncadd [#allocation12], %s107
      %s110 = sshll.u32 [#allocation13], 4
      %s111 = int_to_ptr.vmem [resolvable:$true] %s110
      %113 = dma.hbm_to_vmem [thread:$0]  %s12, 16, %s111, [#allocation12]
    $region53: #{pegb_forward.1} parent=1 // pred_fallthru
      _
    // Predicated region
    $region54: #{pegb_forward.1} parent=1 // pred_check
      _
    $region55: #{pegb_forward.1} parent=1 // pred_check_branch
      %115 = sbr.rel (0) target = $region57
    $region56: #{pegb_forward.1} parent=1 // pred_region
      _
    $region57: #{pegb_forward.1} parent=1 // pred_fallthru
      _
    // Predicated region
    $region58: #{pegb_forward.1} parent=1 // pred_check
      _
    $region59: #{pegb_forward.1} parent=1 // pred_check_branch
      %117 = sbr.rel (0) target = $region61
    $region60: #{pegb_forward.1} parent=1 // pred_region
      _
    $region61: #{pegb_forward.1} parent=1 // pred_fallthru
      _
    // Predicated region
    $region62: #{pegb_forward.1} parent=1 // pred_check
      _
    $region63: #{pegb_forward.1} parent=1 // pred_check_branch
      %119 = sbr.rel (0) target = $region65
    $region64: #{pegb_forward.1} parent=1 // pred_region
      _
    $region65: #{pegb_forward.1} parent=1 // pred_fallthru
      _
    // Predicated region
    $region66: #{pegb_forward.1} parent=1 // pred_check
      _
    $region67: #{pegb_forward.1} parent=1 // pred_check_branch
      %121 = sbr.rel (0) target = $region69
    $region68: #{pegb_forward.1} parent=1 // pred_region
      _
    $region69: #{pegb_forward.1} parent=1 // pred_fallthru
      _
    // Predicated region
    $region70: #{pegb_forward.1} parent=1 // pred_check
      _
    $region71: #{pegb_forward.1} parent=1 // pred_check_branch
      %123 = sbr.rel (0) target = $region73
    $region72: #{pegb_forward.1} parent=1 // pred_region
      %124 = dma.done [#allocation4], 256
    $region73: #{pegb_forward.1} parent=1 // pred_fallthru
      _
    // Predicated region
    $region74: #{pegb_forward.1} parent=1 // pred_check
      _
    $region75: #{pegb_forward.1} parent=1 // pred_check_branch
      %126 = sbr.rel (0) target = $region77
    $region76: #{pegb_forward.1} parent=1 // pred_region
      %127 = dma.done [#allocation6], 128
    $region77: #{pegb_forward.1} parent=1 // pred_fallthru
      _
    // Predicated region
    $region78: #{pegb_forward.1} parent=1 // pred_check
      _
    $region79: #{pegb_forward.1} parent=1 // pred_check_branch
      %129 = sbr.rel (0) target = $region81
    $region80: #{pegb_forward.1} parent=1 // pred_region
      %130 = dma.done [#allocation6], 128
    $region81: #{pegb_forward.1} parent=1 // pred_fallthru
      _
    // Predicated region
    $region82: #{pegb_forward.1} parent=1 // pred_check
      _
    $region83: #{pegb_forward.1} parent=1 // pred_check_branch
      %132 = sbr.rel (0) target = $region85
    $region84: #{pegb_forward.1} parent=1 // pred_region
      %133 = dma.done [#allocation9], 16
    $region85: #{pegb_forward.1} parent=1 // pred_fallthru
      _
    // Predicated region
    $region86: #{pegb_forward.1} parent=1 // pred_check
      _
    $region87: #{pegb_forward.1} parent=1 // pred_check_branch
      %135 = sbr.rel (0) target = $region89
    $region88: #{pegb_forward.1} parent=1 // pred_region
      %136 = dma.done [#allocation9], 3200
    $region89: #{pegb_forward.1} parent=1 // pred_fallthru
      _
    // Predicated region
    $region90: #{pegb_forward.1} parent=1 // pred_check
      _
    $region91: #{pegb_forward.1} parent=1 // pred_check_branch
      %138 = sbr.rel (0) target = $region93
    $region92: #{pegb_forward.1} parent=1 // pred_region
      %139 = dma.done [#allocation12], 16
    $region93: #{pegb_forward.1} parent=1 // pred_fallthru
      _
    // Predicated region
    $region94: #{pegb_forward.1} parent=1 // pred_check
      _
    $region95: #{pegb_forward.1} parent=1 // pred_check_branch
      %141 = sbr.rel (0) target = $region97
    $region96: #{pegb_forward.1} parent=1 // pred_region
      %142 = dma.done [#allocation12], 16
    $region97: #{pegb_forward.1} parent=1 // pred_fallthru
      _
    %v143 = vlaneseq
    %v144 = vand.u32 %v143, 127
    %v145 = vld [vmem:[%s0] sm:$0xff]
    %v146 = vld [vmem:[%s0 + $0x8] sm:$0xff]
    %147 = vset.pattern.permute.xlu0 0
    %148 = vperm.xlu0 %147, %v145
    %v149 = vpop.permute.xlu0 %148
    %150 = vset.pattern.permute.xlu0 0
    %151 = vperm.xlu0 %150, %v146
    %v152 = vpop.permute.xlu0 %151
    %vm153 = vcmp.eq.s32.totalorder %v144, %v149
    %vm154 = vcmp.eq.s32.totalorder %v144, %v152
    %v155 = vsel %vm153, 1, 0
    %v156 = vsel %vm154, 1, 0
    %v157 = vcvt.s32.f32 %v155
    %v158 = vcvt.s32.f32 %v156
    %v159 = vld [vmem:[#allocation3] sm:$0xff]
    %v160 = vld [vmem:[#allocation3 + $0x8] sm:$0xff]
    %vm161 = vcmask 130048
    %v163 = vsel %vm161, %v157, 0
    %v166 = vsel %vm161, %v158, 0
    %168 = vmatprep.subr.mxu0 0.0
    %169 = vmatpush1.msra.mxu0 0.0
    %170 = vmatprep.subr.mxu0 0.0
    %171 = vmatpush1.msra.mxu0 0.0
    %172 = vmatprep.subr.mxu0 0.0
    %173 = vmatpush1.msra.mxu0 0.0
    %174 = vmatprep.subr.mxu0 0.0
    %175 = vmatpush1.msra.mxu0 0.0
    %176 = vmatprep.subr.mxu0 0.0
    %177 = vmatpush1.msra.mxu0 0.0
    %178 = vmatprep.subr.mxu0 0.0
    %179 = vmatpush1.msra.mxu0 0.0
    %180 = vmatprep.subr.mxu0 0.0
    %181 = vmatpush1.msra.mxu0 0.0
    %182 = vmatprep.subr.mxu0 0.0
    %183 = vmatpush1.msra.mxu0 0.0
    %184 = vmatprep.subr.mxu0 0.0
    %185 = vmatpush1.msra.mxu0 0.0
    %186 = vmatprep.subr.mxu0 0.0
    %187 = vmatpush1.msra.mxu0 0.0
    %188 = vmatprep.subr.mxu0 0.0
    %189 = vmatpush1.msra.mxu0 0.0
    %190 = vmatprep.subr.mxu0 0.0
    %191 = vmatpush1.msra.mxu0 0.0
    %192 = vmatprep.subr.mxu0 0.0
    %193 = vmatpush1.msra.mxu0 0.0
    %194 = vmatprep.subr.mxu0 0.0
    %195 = vmatpush1.msra.mxu0 0.0
    %196 = vmatprep.subr.mxu0 0.0
    %197 = vmatpush1.msra.mxu0 %v160
    %198 = vmatprep.subr.mxu0 0.0
    %199 = vmatpush1.msra.mxu0 %v159
    %200 = vmatprep.subr.mxu0 0.0
    %201 = vmatpush2.msra.mxu0 0.0
    %202 = vmatprep.subr.mxu0 0.0
    %203 = vmatpush2.msra.mxu0 0.0
    %204 = vmatprep.subr.mxu0 0.0
    %205 = vmatpush2.msra.mxu0 0.0
    %206 = vmatprep.subr.mxu0 0.0
    %207 = vmatpush2.msra.mxu0 0.0
    %208 = vmatprep.subr.mxu0 0.0
    %209 = vmatpush2.msra.mxu0 0.0
    %210 = vmatprep.subr.mxu0 0.0
    %211 = vmatpush2.msra.mxu0 0.0
    %212 = vmatprep.subr.mxu0 0.0
    %213 = vmatpush2.msra.mxu0 0.0
    %214 = vmatprep.subr.mxu0 0.0
    %215 = vmatpush2.msra.mxu0 0.0
    %216 = vmatprep.subr.mxu0 0.0
    %217 = vmatpush2.msra.mxu0 0.0
    %218 = vmatprep.subr.mxu0 0.0
    %219 = vmatpush2.msra.mxu0 0.0
    %220 = vmatprep.subr.mxu0 0.0
    %221 = vmatpush2.msra.mxu0 0.0
    %222 = vmatprep.subr.mxu0 0.0
    %223 = vmatpush2.msra.mxu0 0.0
    %224 = vmatprep.subr.mxu0 0.0
    %225 = vmatpush2.msra.mxu0 0.0
    %226 = vmatprep.subr.mxu0 0.0
    %227 = vmatpush2.msra.mxu0 0.0
    %228 = vmatprep.subr.mxu0 0.0
    %229 = vmatpush2.msra.mxu0 0.0
    %230 = vmatprep.subr.mxu0 0.0
    %231 = vmatpush2.msra.mxu0 0.0
    %232 = vmatprep.mubr.f32.mxu0 0.0
    %233 = vmatmul.mubr.f32.gmra.mxu0 %v163
    %v234 = vpop.f32.mrf.mxu0
    %v235 = vadd.f32 0.0, %v234
    %v236 = vpop.f32.mrf.mxu0
    %237 = vmatprep.mubr.f32.mxu0 0.0
    %238 = vmatmul.mubr.f32.gmra.mxu0 %v166
    %v239 = vpop.f32.mrf.mxu0
    %v240 = vadd.f32 0.0, %v239
    %v241 = vpop.f32.mrf.mxu0
    %242 = vdwg.mxu0
    %v243 = vld [vmem:[%s1] sm:$0xff]
    %244 = vset.pattern.permute.xlu0 0
    %245 = vperm.xlu0 %244, %v243
    %v246 = vpop.permute.xlu0 %245
    %vm247 = vcmp.eq.s32.totalorder %v144, %v246
    %v248 = vsel %vm247, 1, 0
    %v249 = vcvt.s32.f32 %v248
    %v250 = vld [vmem:[#allocation5] sm:$0xff]
    %vm251 = vcmask 64512
    %v253 = vsel %vm251, %v249, 0
    %255 = vmatprep.subr.mxu0 0.0
    %256 = vmatpush1.msra.mxu0 0.0
    %257 = vmatprep.subr.mxu0 0.0
    %258 = vmatpush1.msra.mxu0 0.0
    %259 = vmatprep.subr.mxu0 0.0
    %260 = vmatpush1.msra.mxu0 0.0
    %261 = vmatprep.subr.mxu0 0.0
    %262 = vmatpush1.msra.mxu0 0.0
    %263 = vmatprep.subr.mxu0 0.0
    %264 = vmatpush1.msra.mxu0 0.0
    %265 = vmatprep.subr.mxu0 0.0
    %266 = vmatpush1.msra.mxu0 0.0
    %267 = vmatprep.subr.mxu0 0.0
    %268 = vmatpush1.msra.mxu0 0.0
    %269 = vmatprep.subr.mxu0 0.0
    %270 = vmatpush1.msra.mxu0 0.0
    %271 = vmatprep.subr.mxu0 0.0
    %272 = vmatpush1.msra.mxu0 0.0
    %273 = vmatprep.subr.mxu0 0.0
    %274 = vmatpush1.msra.mxu0 0.0
    %275 = vmatprep.subr.mxu0 0.0
    %276 = vmatpush1.msra.mxu0 0.0
    %277 = vmatprep.subr.mxu0 0.0
    %278 = vmatpush1.msra.mxu0 0.0
    %279 = vmatprep.subr.mxu0 0.0
    %280 = vmatpush1.msra.mxu0 0.0
    %281 = vmatprep.subr.mxu0 0.0
    %282 = vmatpush1.msra.mxu0 0.0
    %283 = vmatprep.subr.mxu0 0.0
    %284 = vmatpush1.msra.mxu0 0.0
    %285 = vmatprep.subr.mxu0 0.0
    %286 = vmatpush1.msra.mxu0 %v250
    %287 = vmatprep.subr.mxu0 0.0
    %288 = vmatpush2.msra.mxu0 0.0
    %289 = vmatprep.subr.mxu0 0.0
    %290 = vmatpush2.msra.mxu0 0.0
    %291 = vmatprep.subr.mxu0 0.0
    %292 = vmatpush2.msra.mxu0 0.0
    %293 = vmatprep.subr.mxu0 0.0
    %294 = vmatpush2.msra.mxu0 0.0
    %295 = vmatprep.subr.mxu0 0.0
    %296 = vmatpush2.msra.mxu0 0.0
    %297 = vmatprep.subr.mxu0 0.0
    %298 = vmatpush2.msra.mxu0 0.0
    %299 = vmatprep.subr.mxu0 0.0
    %300 = vmatpush2.msra.mxu0 0.0
    %301 = vmatprep.subr.mxu0 0.0
    %302 = vmatpush2.msra.mxu0 0.0
    %303 = vmatprep.subr.mxu0 0.0
    %304 = vmatpush2.msra.mxu0 0.0
    %305 = vmatprep.subr.mxu0 0.0
    %306 = vmatpush2.msra.mxu0 0.0
    %307 = vmatprep.subr.mxu0 0.0
    %308 = vmatpush2.msra.mxu0 0.0
    %309 = vmatprep.subr.mxu0 0.0
    %310 = vmatpush2.msra.mxu0 0.0
    %311 = vmatprep.subr.mxu0 0.0
    %312 = vmatpush2.msra.mxu0 0.0
    %313 = vmatprep.subr.mxu0 0.0
    %314 = vmatpush2.msra.mxu0 0.0
    %315 = vmatprep.subr.mxu0 0.0
    %316 = vmatpush2.msra.mxu0 0.0
    %317 = vmatprep.subr.mxu0 0.0
    %318 = vmatpush2.msra.mxu0 0.0
    %319 = vmatprep.mubr.f32.mxu0 0.0
    %320 = vmatmul.mubr.f32.gmra.mxu0 %v253
    %v321 = vpop.f32.mrf.mxu0
    %v322 = vadd.f32 0.0, %v321
    %v323 = vpop.f32.mrf.mxu0
    %324 = vdwg.mxu0
    %vm325 = vcmask 523264
    %v327 = vsel %vm325, %v235, 0
    %v330 = vsel %vm325, %v240, 0
    %v333 = vsel %vm325, %v322, 0
    %335 = vmatprep.subr.mxu0 0.0
    %336 = vmatpush1.xpose.msra.mxu0 0.0
    %337 = vmatprep.subr.mxu0 0.0
    %338 = vmatpush1.xpose.msra.mxu0 0.0
    %339 = vmatprep.subr.mxu0 0.0
    %340 = vmatpush1.xpose.msra.mxu0 0.0
    %341 = vmatprep.subr.mxu0 0.0
    %342 = vmatpush1.xpose.msra.mxu0 0.0
    %343 = vmatprep.subr.mxu0 0.0
    %344 = vmatpush1.xpose.msra.mxu0 0.0
    %345 = vmatprep.subr.mxu0 0.0
    %346 = vmatpush1.xpose.msra.mxu0 0.0
    %347 = vmatprep.subr.mxu0 0.0
    %348 = vmatpush1.xpose.msra.mxu0 0.0
    %349 = vmatprep.subr.mxu0 0.0
    %350 = vmatpush1.xpose.msra.mxu0 0.0
    %351 = vmatprep.subr.mxu0 0.0
    %352 = vmatpush1.xpose.msra.mxu0 0.0
    %353 = vmatprep.subr.mxu0 0.0
    %354 = vmatpush1.xpose.msra.mxu0 0.0
    %355 = vmatprep.subr.mxu0 0.0
    %356 = vmatpush1.xpose.msra.mxu0 0.0
    %357 = vmatprep.subr.mxu0 0.0
    %358 = vmatpush1.xpose.msra.mxu0 0.0
    %359 = vmatprep.subr.mxu0 0.0
    %360 = vmatpush1.xpose.msra.mxu0 0.0
    %361 = vmatprep.subr.mxu0 0.0
    %362 = vmatpush1.xpose.msra.mxu0 %v333
    %363 = vmatprep.subr.mxu0 0.0
    %364 = vmatpush1.xpose.msra.mxu0 %v330
    %365 = vmatprep.subr.mxu0 0.0
    %366 = vmatpush1.xpose.msra.mxu0 %v327
    %367 = vmatprep.subr.mxu0 0.0
    %368 = vmatpush2.xpose.msra.mxu0 0.0
    %369 = vmatprep.subr.mxu0 0.0
    %370 = vmatpush2.xpose.msra.mxu0 0.0
    %371 = vmatprep.subr.mxu0 0.0
    %372 = vmatpush2.xpose.msra.mxu0 0.0
    %373 = vmatprep.subr.mxu0 0.0
    %374 = vmatpush2.xpose.msra.mxu0 0.0
    %375 = vmatprep.subr.mxu0 0.0
    %376 = vmatpush2.xpose.msra.mxu0 0.0
    %377 = vmatprep.subr.mxu0 0.0
    %378 = vmatpush2.xpose.msra.mxu0 0.0
    %379 = vmatprep.subr.mxu0 0.0
    %380 = vmatpush2.xpose.msra.mxu0 0.0
    %381 = vmatprep.subr.mxu0 0.0
    %382 = vmatpush2.xpose.msra.mxu0 0.0
    %383 = vmatprep.subr.mxu0 0.0
    %384 = vmatpush2.xpose.msra.mxu0 0.0
    %385 = vmatprep.subr.mxu0 0.0
    %386 = vmatpush2.xpose.msra.mxu0 0.0
    %387 = vmatprep.subr.mxu0 0.0
    %388 = vmatpush2.xpose.msra.mxu0 0.0
    %389 = vmatprep.subr.mxu0 0.0
    %390 = vmatpush2.xpose.msra.mxu0 0.0
    %391 = vmatprep.subr.mxu0 0.0
    %392 = vmatpush2.xpose.msra.mxu0 0.0
    %393 = vmatprep.subr.mxu0 0.0
    %394 = vmatpush2.xpose.msra.mxu0 0.0
    %395 = vmatprep.subr.mxu0 0.0
    %396 = vmatpush2.xpose.msra.mxu0 0.0
    %397 = vmatprep.subr.mxu0 0.0
    %398 = vmatpush2.xpose.msra.mxu0 0.0
    %399 = vmatprep.mubr.f32.mxu0 0.0
    %400 = vmatmul.mubr.f32.gmra.mxu0 %v327
    %v401 = vpop.f32.mrf.mxu0
    %v402 = vadd.f32 0.0, %v401
    %v403 = vpop.f32.mrf.mxu0
    %404 = vmatprep.mubr.f32.mxu0 0.0
    %405 = vmatmul.mubr.f32.gmra.mxu0 %v330
    %v406 = vpop.f32.mrf.mxu0
    %v407 = vadd.f32 0.0, %v406
    %v408 = vpop.f32.mrf.mxu0
    %409 = vmatprep.mubr.f32.mxu0 0.0
    %410 = vmatmul.mubr.f32.gmra.mxu0 %v333
    %v411 = vpop.f32.mrf.mxu0
    %v412 = vadd.f32 0.0, %v411
    %v413 = vpop.f32.mrf.mxu0
    %414 = vdwg.mxu0
    %v415 = vld [vmem:[%s7] sm:$0xff]
    %v416 = vld [vmem:[%s7 + $0x8] sm:$0xff]
    %v417 = vmax.f32 %v402, 0.0
    %v418 = vmax.f32 %v407, 0.0
    %421 = vrot.lane.b32.xlu0 %v415, 16
    %v422 = vpop.permute.xlu0 %421
    %423 = vrot.lane.b32.xlu0 %v416, 16
    %v424 = vpop.permute.xlu0 %423
    %v427 = vmul.f32 %v402, %v422
    %v428 = vmul.f32 %v407, %v424
    %v429 = vsub.f32 %v417, %v427
    %v430 = vsub.f32 %v418, %v428
    %v431 = vand.u32 2147483647, %v402
    %v432 = vand.u32 2147483647, %v407
    %v433 = vsub.f32 0.0, %v431
    %v434 = vsub.f32 0.0, %v432
    %v435 = vmul.f32 %v433, 1.442695
    %v436 = vpow.pop %v435
    %v437 = vmul.f32 %v434, 1.442695
    %v438 = vpow.pop %v437
    %v439 = vadd.f32 %v436, 1.0
    %v440 = vadd.f32 %v438, 1.0
    %v441 = vlog2.pop %v439
    %v442 = vmul.f32 %v441, 0.6931472
    %v443 = vlog2.pop %v440
    %v444 = vmul.f32 %v443, 0.6931472
    %v445 = vadd.f32 %v429, %v442
    %v446 = vadd.f32 %v430, %v444
    %449 = vrot.lane.b32.xlu0 %v445, 112
    %v450 = vpop.permute.xlu0 %449
    %451 = vrot.lane.b32.xlu0 %v446, 112
    %v452 = vpop.permute.xlu0 %451
    %v455 = vsel %vm251, %v450, 0.0
    %v456 = vsel %vm251, %v452, 0.0
    %v457 = vadd.f32 %v455, %v456
    %458 = vadd.xlane.f32.xlu0 %v457
    %v459 = vpop.xlane.xlu0 %458
    %v460 = vrot.slane %v459, 4
    %v461 = vadd.f32 %v459, %v460
    %v462 = vrot.slane %v461, 2
    %v463 = vadd.f32 %v461, %v462
    %v464 = vrot.slane %v463, 1
    %v465 = vadd.f32 %v463, %v464
    %s466 = vtos %v465
    %s467 = smul.f32 %s466, 0.0078125
    %v468 = vld [vmem:[%s8] sm:$0xff]
    %v469 = vld [vmem:[%s8 + $0x8] sm:$0xff]
    %v470 = vmul.f32 %v402, %v468
    %v471 = vmul.f32 %v407, %v469
    %v472 = vsub.f32 %v417, %v470
    %v473 = vsub.f32 %v418, %v471
    %v474 = vadd.f32 %v472, %v442
    %v475 = vadd.f32 %v473, %v444
    %v476 = vsel %vm161, %v474, 0.0
    %v477 = vsel %vm161, %v475, 0.0
    %v478 = vadd.f32 %v476, %v477
    %479 = vadd.xlane.f32.xlu0 %v478
    %v480 = vpop.xlane.xlu0 %479
    %v481 = vrot.slane %v480, 4
    %v482 = vadd.f32 %v480, %v481
    %v483 = vrot.slane %v482, 2
    %v484 = vadd.f32 %v482, %v483
    %v485 = vrot.slane %v484, 1
    %v486 = vadd.f32 %v484, %v485
    %s487 = vtos %v486
    %s488 = smul.f32 %s487, 0.00390625
    %v489 = vld [vmem:[%s9] sm:$0xff]
    %v490 = vmax.f32 %v412, 0.0
    %492 = vrot.lane.b32.xlu0 %v489, 16
    %v493 = vpop.permute.xlu0 %492
    %v495 = vmul.f32 %v412, %v493
    %v496 = vsub.f32 %v490, %v495
    %v497 = vand.u32 2147483647, %v412
    %v498 = vsub.f32 0.0, %v497
    %v499 = vmul.f32 %v498, 1.442695
    %v500 = vpow.pop %v499
    %v501 = vadd.f32 %v500, 1.0
    %v502 = vlog2.pop %v501
    %v503 = vmul.f32 %v502, 0.6931472
    %v504 = vadd.f32 %v496, %v503
    %506 = vrot.lane.b32.xlu0 %v504, 112
    %v507 = vpop.permute.xlu0 %506
    %v509 = vsel %vm251, %v507, 0.0
    %510 = vadd.xlane.f32.xlu0 %v509
    %v511 = vpop.xlane.xlu0 %510
    %v512 = vrot.slane %v511, 4
    %v513 = vadd.f32 %v511, %v512
    %v514 = vrot.slane %v513, 2
    %v515 = vadd.f32 %v513, %v514
    %v516 = vrot.slane %v515, 1
    %v517 = vadd.f32 %v515, %v516
    %s518 = vtos %v517
    %s519 = smul.f32 %s518, 0.015625
    %v520 = vsel %vm251, %v415, 0.0
    %521 = vadd.xlane.f32.xlu0 %v520
    %v522 = vpop.xlane.xlu0 %521
    %v523 = vsel %vm251, %v416, 0.0
    %524 = vadd.xlane.f32.xlu0 %v523
    %v525 = vpop.xlane.xlu0 %524
    %v526 = vrcp.pop %v522
    %v527 = vrcp.pop %v525
    %v528 = vsel %vm251, %v415, 0
    %v530 = vsel %vm251, %v416, 0
    %532 = vmatprep.subr.mxu0 0.0
    %533 = vmatpush1.msra.mxu0 0.0
    %534 = vmatprep.subr.mxu0 0.0
    %535 = vmatpush1.msra.mxu0 0.0
    %536 = vmatprep.subr.mxu0 0.0
    %537 = vmatpush1.msra.mxu0 0.0
    %538 = vmatprep.subr.mxu0 0.0
    %539 = vmatpush1.msra.mxu0 0.0
    %540 = vmatprep.subr.mxu0 0.0
    %541 = vmatpush1.msra.mxu0 0.0
    %542 = vmatprep.subr.mxu0 0.0
    %543 = vmatpush1.msra.mxu0 0.0
    %544 = vmatprep.subr.mxu0 0.0
    %545 = vmatpush1.msra.mxu0 0.0
    %546 = vmatprep.subr.mxu0 0.0
    %547 = vmatpush1.msra.mxu0 0.0
    %548 = vmatprep.subr.mxu0 0.0
    %549 = vmatpush1.msra.mxu0 0.0
    %550 = vmatprep.subr.mxu0 0.0
    %551 = vmatpush1.msra.mxu0 0.0
    %552 = vmatprep.subr.mxu0 0.0
    %553 = vmatpush1.msra.mxu0 0.0
    %554 = vmatprep.subr.mxu0 0.0
    %555 = vmatpush1.msra.mxu0 0.0
    %556 = vmatprep.subr.mxu0 0.0
    %557 = vmatpush1.msra.mxu0 0.0
    %558 = vmatprep.subr.mxu0 0.0
    %559 = vmatpush1.msra.mxu0 0.0
    %560 = vmatprep.subr.mxu0 0.0
    %561 = vmatpush1.msra.mxu0 0.0
    %562 = vmatprep.subr.mxu0 0.0
    %563 = vmatpush1.msra.mxu0 %v322
    %564 = vmatprep.subr.mxu0 0.0
    %565 = vmatpush2.msra.mxu0 0.0
    %566 = vmatprep.subr.mxu0 0.0
    %567 = vmatpush2.msra.mxu0 0.0
    %568 = vmatprep.subr.mxu0 0.0
    %569 = vmatpush2.msra.mxu0 0.0
    %570 = vmatprep.subr.mxu0 0.0
    %571 = vmatpush2.msra.mxu0 0.0
    %572 = vmatprep.subr.mxu0 0.0
    %573 = vmatpush2.msra.mxu0 0.0
    %574 = vmatprep.subr.mxu0 0.0
    %575 = vmatpush2.msra.mxu0 0.0
    %576 = vmatprep.subr.mxu0 0.0
    %577 = vmatpush2.msra.mxu0 0.0
    %578 = vmatprep.subr.mxu0 0.0
    %579 = vmatpush2.msra.mxu0 0.0
    %580 = vmatprep.subr.mxu0 0.0
    %581 = vmatpush2.msra.mxu0 0.0
    %582 = vmatprep.subr.mxu0 0.0
    %583 = vmatpush2.msra.mxu0 0.0
    %584 = vmatprep.subr.mxu0 0.0
    %585 = vmatpush2.msra.mxu0 0.0
    %586 = vmatprep.subr.mxu0 0.0
    %587 = vmatpush2.msra.mxu0 0.0
    %588 = vmatprep.subr.mxu0 0.0
    %589 = vmatpush2.msra.mxu0 0.0
    %590 = vmatprep.subr.mxu0 0.0
    %591 = vmatpush2.msra.mxu0 0.0
    %592 = vmatprep.subr.mxu0 0.0
    %593 = vmatpush2.msra.mxu0 0.0
    %594 = vmatprep.subr.mxu0 0.0
    %595 = vmatpush2.msra.mxu0 0.0
    %596 = vmatprep.mubr.f32.mxu0 0.0
    %597 = vmatmul.mubr.f32.gmra.mxu0 %v528
    %v598 = vpop.f32.mrf.mxu0
    %v599 = vadd.f32 0.0, %v598
    %v600 = vpop.f32.mrf.mxu0
    %601 = vmatprep.mubr.f32.mxu0 0.0
    %602 = vmatmul.mubr.f32.gmra.mxu0 %v530
    %v603 = vpop.f32.mrf.mxu0
    %v604 = vadd.f32 0.0, %v603
    %v605 = vpop.f32.mrf.mxu0
    %606 = vdwg.mxu0
    %v607 = vmul.f32 %v599, %v526
    %v608 = vmul.f32 %v604, %v527
    %v609 = vld [vmem:[%s4] sm:$0xff]
    %v610 = vld [vmem:[%s4 + $0x8] sm:$0xff]
    %v611 = vld [vmem:[#allocation7] sm:$0xff]
    %v612 = vld [vmem:[#allocation8] sm:$0x1]
    %v614 = vlaneseq
    %v615 = vshrl.u32 %v614, 7
    %v616 = vsub.s32 0, %v615
    %v617 = vrot.slane %v612, %v616
    %v620 = vsel %vm251, %v609, 0
    %v623 = vsel %vm251, %v610, 0
    %625 = vmatprep.subr.mxu0 0.0
    %626 = vmatpush1.msra.mxu0 0.0
    %627 = vmatprep.subr.mxu0 0.0
    %628 = vmatpush1.msra.mxu0 0.0
    %629 = vmatprep.subr.mxu0 0.0
    %630 = vmatpush1.msra.mxu0 0.0
    %631 = vmatprep.subr.mxu0 0.0
    %632 = vmatpush1.msra.mxu0 0.0
    %633 = vmatprep.subr.mxu0 0.0
    %634 = vmatpush1.msra.mxu0 0.0
    %635 = vmatprep.subr.mxu0 0.0
    %636 = vmatpush1.msra.mxu0 0.0
    %637 = vmatprep.subr.mxu0 0.0
    %638 = vmatpush1.msra.mxu0 0.0
    %639 = vmatprep.subr.mxu0 0.0
    %640 = vmatpush1.msra.mxu0 0.0
    %641 = vmatprep.subr.mxu0 0.0
    %642 = vmatpush1.msra.mxu0 0.0
    %643 = vmatprep.subr.mxu0 0.0
    %644 = vmatpush1.msra.mxu0 0.0
    %645 = vmatprep.subr.mxu0 0.0
    %646 = vmatpush1.msra.mxu0 0.0
    %647 = vmatprep.subr.mxu0 0.0
    %648 = vmatpush1.msra.mxu0 0.0
    %649 = vmatprep.subr.mxu0 0.0
    %650 = vmatpush1.msra.mxu0 0.0
    %651 = vmatprep.subr.mxu0 0.0
    %652 = vmatpush1.msra.mxu0 0.0
    %653 = vmatprep.subr.mxu0 0.0
    %654 = vmatpush1.msra.mxu0 0.0
    %655 = vmatprep.subr.mxu0 0.0
    %656 = vmatpush1.msra.mxu0 %v611
    %657 = vmatprep.subr.mxu0 0.0
    %658 = vmatpush2.msra.mxu0 0.0
    %659 = vmatprep.subr.mxu0 0.0
    %660 = vmatpush2.msra.mxu0 0.0
    %661 = vmatprep.subr.mxu0 0.0
    %662 = vmatpush2.msra.mxu0 0.0
    %663 = vmatprep.subr.mxu0 0.0
    %664 = vmatpush2.msra.mxu0 0.0
    %665 = vmatprep.subr.mxu0 0.0
    %666 = vmatpush2.msra.mxu0 0.0
    %667 = vmatprep.subr.mxu0 0.0
    %668 = vmatpush2.msra.mxu0 0.0
    %669 = vmatprep.subr.mxu0 0.0
    %670 = vmatpush2.msra.mxu0 0.0
    %671 = vmatprep.subr.mxu0 0.0
    %672 = vmatpush2.msra.mxu0 0.0
    %673 = vmatprep.subr.mxu0 0.0
    %674 = vmatpush2.msra.mxu0 0.0
    %675 = vmatprep.subr.mxu0 0.0
    %676 = vmatpush2.msra.mxu0 0.0
    %677 = vmatprep.subr.mxu0 0.0
    %678 = vmatpush2.msra.mxu0 0.0
    %679 = vmatprep.subr.mxu0 0.0
    %680 = vmatpush2.msra.mxu0 0.0
    %681 = vmatprep.subr.mxu0 0.0
    %682 = vmatpush2.msra.mxu0 0.0
    %683 = vmatprep.subr.mxu0 0.0
    %684 = vmatpush2.msra.mxu0 0.0
    %685 = vmatprep.subr.mxu0 0.0
    %686 = vmatpush2.msra.mxu0 0.0
    %687 = vmatprep.subr.mxu0 0.0
    %688 = vmatpush2.msra.mxu0 0.0
    %689 = vmatprep.mubr.f32.mxu0 0.0
    %690 = vmatmul.mubr.f32.gmra.mxu0 %v620
    %v691 = vpop.f32.mrf.mxu0
    %v692 = vadd.f32 %v617, %v691
    %v693 = vpop.f32.mrf.mxu0
    %694 = vmatprep.mubr.f32.mxu0 0.0
    %695 = vmatmul.mubr.f32.gmra.mxu0 %v623
    %v696 = vpop.f32.mrf.mxu0
    %v697 = vadd.f32 %v617, %v696
    %v698 = vpop.f32.mrf.mxu0
    %699 = vdwg.mxu0
    %v700 = vmul.f32 %v235, %v607
    %v701 = vmul.f32 %v240, %v608
    %v702 = vsel %vm325, %v700, 0.0
    %703 = vadd.xlane.f32.xlu0 %v702
    %v704 = vpop.xlane.xlu0 %703
    %v705 = vsel %vm325, %v701, 0.0
    %706 = vadd.xlane.f32.xlu0 %v705
    %v707 = vpop.xlane.xlu0 %706
    %v708 = vmul.f32 %v235, %v692
    %v709 = vmul.f32 %v240, %v697
    %v710 = vsel %vm325, %v708, 0.0
    %711 = vadd.xlane.f32.xlu0 %v710
    %v712 = vpop.xlane.xlu0 %711
    %v713 = vsel %vm325, %v709, 0.0
    %714 = vadd.xlane.f32.xlu0 %v713
    %v715 = vpop.xlane.xlu0 %714
    %v716 = vmul.f32 %v607, %v692
    %v717 = vmul.f32 %v608, %v697
    %v718 = vsel %vm325, %v716, 0.0
    %719 = vadd.xlane.f32.xlu0 %v718
    %v720 = vpop.xlane.xlu0 %719
    %v721 = vsel %vm325, %v717, 0.0
    %722 = vadd.xlane.f32.xlu0 %v721
    %v723 = vpop.xlane.xlu0 %722
    %v724 = vld [vmem:[%s15] sm:$0xff]
    %v725 = vld [vmem:[%s15 + $0x8] sm:$0xff]
    %v726 = vld [vmem:[%s16] sm:$0xff]
    %v727 = vld [vmem:[%s16 + $0x8] sm:$0xff]
    %v728 = vmul.f32 %v704, %v726
    %v729 = vmul.f32 %v707, %v727
    %s730 = scalar_lea.vmem %s15, 16
    %v731 = vld [vmem:[%s730] sm:$0xff]
    %v732 = vld [vmem:[%s730 + $0x8] sm:$0xff]
    %s733 = scalar_lea.vmem %s16, 16
    %v734 = vld [vmem:[%s733] sm:$0xff]
    %v735 = vld [vmem:[%s733 + $0x8] sm:$0xff]
    %v736 = vmul.f32 %v712, %v734
    %v737 = vmul.f32 %v715, %v735
    %v739 = vsel %vm161, %v731, 0
    %v742 = vsel %vm161, %v732, 0
    %744 = vmatprep.subr.mxu0 0.0
    %745 = vmatpush1.msra.mxu0 0.0
    %746 = vmatprep.subr.mxu0 0.0
    %747 = vmatpush1.msra.mxu0 0.0
    %748 = vmatprep.subr.mxu0 0.0
    %749 = vmatpush1.msra.mxu0 0.0
    %750 = vmatprep.subr.mxu0 0.0
    %751 = vmatpush1.msra.mxu0 0.0
    %752 = vmatprep.subr.mxu0 0.0
    %753 = vmatpush1.msra.mxu0 0.0
    %754 = vmatprep.subr.mxu0 0.0
    %755 = vmatpush1.msra.mxu0 0.0
    %756 = vmatprep.subr.mxu0 0.0
    %757 = vmatpush1.msra.mxu0 0.0
    %758 = vmatprep.subr.mxu0 0.0
    %759 = vmatpush1.msra.mxu0 0.0
    %760 = vmatprep.subr.mxu0 0.0
    %761 = vmatpush1.msra.mxu0 0.0
    %762 = vmatprep.subr.mxu0 0.0
    %763 = vmatpush1.msra.mxu0 0.0
    %764 = vmatprep.subr.mxu0 0.0
    %765 = vmatpush1.msra.mxu0 0.0
    %766 = vmatprep.subr.mxu0 0.0
    %767 = vmatpush1.msra.mxu0 0.0
    %768 = vmatprep.subr.mxu0 0.0
    %769 = vmatpush1.msra.mxu0 0.0
    %770 = vmatprep.subr.mxu0 0.0
    %771 = vmatpush1.msra.mxu0 0.0
    %772 = vmatprep.subr.mxu0 0.0
    %773 = vmatpush1.msra.mxu0 %v737
    %774 = vmatprep.subr.mxu0 0.0
    %775 = vmatpush1.msra.mxu0 %v736
    %776 = vmatprep.subr.mxu0 0.0
    %777 = vmatpush2.msra.mxu0 0.0
    %778 = vmatprep.subr.mxu0 0.0
    %779 = vmatpush2.msra.mxu0 0.0
    %780 = vmatprep.subr.mxu0 0.0
    %781 = vmatpush2.msra.mxu0 0.0
    %782 = vmatprep.subr.mxu0 0.0
    %783 = vmatpush2.msra.mxu0 0.0
    %784 = vmatprep.subr.mxu0 0.0
    %785 = vmatpush2.msra.mxu0 0.0
    %786 = vmatprep.subr.mxu0 0.0
    %787 = vmatpush2.msra.mxu0 0.0
    %788 = vmatprep.subr.mxu0 0.0
    %789 = vmatpush2.msra.mxu0 0.0
    %790 = vmatprep.subr.mxu0 0.0
    %791 = vmatpush2.msra.mxu0 0.0
    %792 = vmatprep.subr.mxu0 0.0
    %793 = vmatpush2.msra.mxu0 0.0
    %794 = vmatprep.subr.mxu0 0.0
    %795 = vmatpush2.msra.mxu0 0.0
    %796 = vmatprep.subr.mxu0 0.0
    %797 = vmatpush2.msra.mxu0 0.0
    %798 = vmatprep.subr.mxu0 0.0
    %799 = vmatpush2.msra.mxu0 0.0
    %800 = vmatprep.subr.mxu0 0.0
    %801 = vmatpush2.msra.mxu0 0.0
    %802 = vmatprep.subr.mxu0 0.0
    %803 = vmatpush2.msra.mxu0 0.0
    %804 = vmatprep.subr.mxu0 0.0
    %805 = vmatpush2.msra.mxu0 0.0
    %806 = vmatprep.subr.mxu0 0.0
    %807 = vmatpush2.msra.mxu0 0.0
    %808 = vmatprep.mubr.f32.mxu0 0.0
    %809 = vmatmul.mubr.f32.gmra.mxu0 %v739
    %v810 = vpop.f32.mrf.mxu0
    %v811 = vadd.f32 0.0, %v810
    %v812 = vpop.f32.mrf.mxu0
    %813 = vmatprep.mubr.f32.mxu0 0.0
    %814 = vmatmul.mubr.f32.gmra.mxu0 %v742
    %v815 = vpop.f32.mrf.mxu0
    %v816 = vadd.f32 0.0, %v815
    %v817 = vpop.f32.mrf.mxu0
    %818 = vdwg.mxu0
    %v820 = vsel %vm161, %v724, 0
    %v823 = vsel %vm161, %v725, 0
    %825 = vmatprep.subr.mxu0 0.0
    %826 = vmatpush1.msra.mxu0 0.0
    %827 = vmatprep.subr.mxu0 0.0
    %828 = vmatpush1.msra.mxu0 0.0
    %829 = vmatprep.subr.mxu0 0.0
    %830 = vmatpush1.msra.mxu0 0.0
    %831 = vmatprep.subr.mxu0 0.0
    %832 = vmatpush1.msra.mxu0 0.0
    %833 = vmatprep.subr.mxu0 0.0
    %834 = vmatpush1.msra.mxu0 0.0
    %835 = vmatprep.subr.mxu0 0.0
    %836 = vmatpush1.msra.mxu0 0.0
    %837 = vmatprep.subr.mxu0 0.0
    %838 = vmatpush1.msra.mxu0 0.0
    %839 = vmatprep.subr.mxu0 0.0
    %840 = vmatpush1.msra.mxu0 0.0
    %841 = vmatprep.subr.mxu0 0.0
    %842 = vmatpush1.msra.mxu0 0.0
    %843 = vmatprep.subr.mxu0 0.0
    %844 = vmatpush1.msra.mxu0 0.0
    %845 = vmatprep.subr.mxu0 0.0
    %846 = vmatpush1.msra.mxu0 0.0
    %847 = vmatprep.subr.mxu0 0.0
    %848 = vmatpush1.msra.mxu0 0.0
    %849 = vmatprep.subr.mxu0 0.0
    %850 = vmatpush1.msra.mxu0 0.0
    %851 = vmatprep.subr.mxu0 0.0
    %852 = vmatpush1.msra.mxu0 0.0
    %853 = vmatprep.subr.mxu0 0.0
    %854 = vmatpush1.msra.mxu0 %v729
    %855 = vmatprep.subr.mxu0 0.0
    %856 = vmatpush1.msra.mxu0 %v728
    %857 = vmatprep.subr.mxu0 0.0
    %858 = vmatpush2.msra.mxu0 0.0
    %859 = vmatprep.subr.mxu0 0.0
    %860 = vmatpush2.msra.mxu0 0.0
    %861 = vmatprep.subr.mxu0 0.0
    %862 = vmatpush2.msra.mxu0 0.0
    %863 = vmatprep.subr.mxu0 0.0
    %864 = vmatpush2.msra.mxu0 0.0
    %865 = vmatprep.subr.mxu0 0.0
    %866 = vmatpush2.msra.mxu0 0.0
    %867 = vmatprep.subr.mxu0 0.0
    %868 = vmatpush2.msra.mxu0 0.0
    %869 = vmatprep.subr.mxu0 0.0
    %870 = vmatpush2.msra.mxu0 0.0
    %871 = vmatprep.subr.mxu0 0.0
    %872 = vmatpush2.msra.mxu0 0.0
    %873 = vmatprep.subr.mxu0 0.0
    %874 = vmatpush2.msra.mxu0 0.0
    %875 = vmatprep.subr.mxu0 0.0
    %876 = vmatpush2.msra.mxu0 0.0
    %877 = vmatprep.subr.mxu0 0.0
    %878 = vmatpush2.msra.mxu0 0.0
    %879 = vmatprep.subr.mxu0 0.0
    %880 = vmatpush2.msra.mxu0 0.0
    %881 = vmatprep.subr.mxu0 0.0
    %882 = vmatpush2.msra.mxu0 0.0
    %883 = vmatprep.subr.mxu0 0.0
    %884 = vmatpush2.msra.mxu0 0.0
    %885 = vmatprep.subr.mxu0 0.0
    %886 = vmatpush2.msra.mxu0 0.0
    %887 = vmatprep.subr.mxu0 0.0
    %888 = vmatpush2.msra.mxu0 0.0
    %889 = vmatprep.mubr.f32.mxu0 0.0
    %890 = vmatmul.mubr.f32.gmra.mxu0 %v820
    %v891 = vpop.f32.mrf.mxu0
    %v892 = vadd.f32 %v811, %v891
    %v893 = vpop.f32.mrf.mxu0
    %894 = vmatprep.mubr.f32.mxu0 0.0
    %895 = vmatmul.mubr.f32.gmra.mxu0 %v823
    %v896 = vpop.f32.mrf.mxu0
    %v897 = vadd.f32 %v816, %v896
    %v898 = vpop.f32.mrf.mxu0
    %899 = vdwg.mxu0
    %s900 = scalar_lea.vmem %s15, 32
    %v901 = vld [vmem:[%s900] sm:$0xff]
    %v902 = vld [vmem:[%s900 + $0x8] sm:$0xff]
    %s903 = scalar_lea.vmem %s16, 32
    %v904 = vld [vmem:[%s903] sm:$0xff]
    %v905 = vld [vmem:[%s903 + $0x8] sm:$0xff]
    %v906 = vmul.f32 %v720, %v904
    %v907 = vmul.f32 %v723, %v905
    %v909 = vsel %vm161, %v901, 0
    %v912 = vsel %vm161, %v902, 0
    %914 = vmatprep.subr.mxu0 0.0
    %915 = vmatpush1.msra.mxu0 0.0
    %916 = vmatprep.subr.mxu0 0.0
    %917 = vmatpush1.msra.mxu0 0.0
    %918 = vmatprep.subr.mxu0 0.0
    %919 = vmatpush1.msra.mxu0 0.0
    %920 = vmatprep.subr.mxu0 0.0
    %921 = vmatpush1.msra.mxu0 0.0
    %922 = vmatprep.subr.mxu0 0.0
    %923 = vmatpush1.msra.mxu0 0.0
    %924 = vmatprep.subr.mxu0 0.0
    %925 = vmatpush1.msra.mxu0 0.0
    %926 = vmatprep.subr.mxu0 0.0
    %927 = vmatpush1.msra.mxu0 0.0
    %928 = vmatprep.subr.mxu0 0.0
    %929 = vmatpush1.msra.mxu0 0.0
    %930 = vmatprep.subr.mxu0 0.0
    %931 = vmatpush1.msra.mxu0 0.0
    %932 = vmatprep.subr.mxu0 0.0
    %933 = vmatpush1.msra.mxu0 0.0
    %934 = vmatprep.subr.mxu0 0.0
    %935 = vmatpush1.msra.mxu0 0.0
    %936 = vmatprep.subr.mxu0 0.0
    %937 = vmatpush1.msra.mxu0 0.0
    %938 = vmatprep.subr.mxu0 0.0
    %939 = vmatpush1.msra.mxu0 0.0
    %940 = vmatprep.subr.mxu0 0.0
    %941 = vmatpush1.msra.mxu0 0.0
    %942 = vmatprep.subr.mxu0 0.0
    %943 = vmatpush1.msra.mxu0 %v907
    %944 = vmatprep.subr.mxu0 0.0
    %945 = vmatpush1.msra.mxu0 %v906
    %946 = vmatprep.subr.mxu0 0.0
    %947 = vmatpush2.msra.mxu0 0.0
    %948 = vmatprep.subr.mxu0 0.0
    %949 = vmatpush2.msra.mxu0 0.0
    %950 = vmatprep.subr.mxu0 0.0
    %951 = vmatpush2.msra.mxu0 0.0
    %952 = vmatprep.subr.mxu0 0.0
    %953 = vmatpush2.msra.mxu0 0.0
    %954 = vmatprep.subr.mxu0 0.0
    %955 = vmatpush2.msra.mxu0 0.0
    %956 = vmatprep.subr.mxu0 0.0
    %957 = vmatpush2.msra.mxu0 0.0
    %958 = vmatprep.subr.mxu0 0.0
    %959 = vmatpush2.msra.mxu0 0.0
    %960 = vmatprep.subr.mxu0 0.0
    %961 = vmatpush2.msra.mxu0 0.0
    %962 = vmatprep.subr.mxu0 0.0
    %963 = vmatpush2.msra.mxu0 0.0
    %964 = vmatprep.subr.mxu0 0.0
    %965 = vmatpush2.msra.mxu0 0.0
    %966 = vmatprep.subr.mxu0 0.0
    %967 = vmatpush2.msra.mxu0 0.0
    %968 = vmatprep.subr.mxu0 0.0
    %969 = vmatpush2.msra.mxu0 0.0
    %970 = vmatprep.subr.mxu0 0.0
    %971 = vmatpush2.msra.mxu0 0.0
    %972 = vmatprep.subr.mxu0 0.0
    %973 = vmatpush2.msra.mxu0 0.0
    %974 = vmatprep.subr.mxu0 0.0
    %975 = vmatpush2.msra.mxu0 0.0
    %976 = vmatprep.subr.mxu0 0.0
    %977 = vmatpush2.msra.mxu0 0.0
    %978 = vmatprep.mubr.f32.mxu0 0.0
    %979 = vmatmul.mubr.f32.gmra.mxu0 %v909
    %v980 = vpop.f32.mrf.mxu0
    %v981 = vadd.f32 0.0, %v980
    %v982 = vpop.f32.mrf.mxu0
    %983 = vmatprep.mubr.f32.mxu0 0.0
    %984 = vmatmul.mubr.f32.gmra.mxu0 %v912
    %v985 = vpop.f32.mrf.mxu0
    %v986 = vadd.f32 0.0, %v985
    %v987 = vpop.f32.mrf.mxu0
    %988 = vdwg.mxu0
    %v989 = vadd.f32 %v892, %v981
    %v990 = vadd.f32 %v897, %v986
    %v991 = vld [vmem:[#allocation10] sm:$0xff]
    %v992 = vld [vmem:[#allocation10 + $0x8] sm:$0xff]
    %v993 = vld [vmem:[#allocation10 + $0x10] sm:$0xff]
    %v994 = vld [vmem:[#allocation10 + $0x18] sm:$0xff]
    %v995 = vld [vmem:[#allocation10 + $0x20] sm:$0xff]
    %v996 = vld [vmem:[#allocation10 + $0x28] sm:$0xff]
    %v997 = vld [vmem:[#allocation10 + $0x30] sm:$0xff]
    %v998 = vld [vmem:[#allocation10 + $0x38] sm:$0xff]
    %v999 = vld [vmem:[#allocation10 + $0x40] sm:$0xff]
    %v1000 = vld [vmem:[#allocation10 + $0x48] sm:$0xff]
    %v1001 = vld [vmem:[#allocation10 + $0x50] sm:$0xff]
    %v1002 = vld [vmem:[#allocation10 + $0x58] sm:$0xff]
    %v1003 = vld [vmem:[#allocation10 + $0x60] sm:$0xff]
    %v1004 = vld [vmem:[#allocation10 + $0x68] sm:$0xff]
    %v1005 = vld [vmem:[#allocation10 + $0x70] sm:$0xff]
    %v1006 = vld [vmem:[#allocation10 + $0x78] sm:$0xff]
    %v1008 = vsel %vm325, %v607, 0
    %v1011 = vsel %vm325, %v608, 0
    %1013 = vmatprep.subr.mxu0 0.0
    %1014 = vmatpush1.msra.mxu0 0.0
    %1015 = vmatprep.subr.mxu0 0.0
    %1016 = vmatpush1.msra.mxu0 0.0
    %1017 = vmatprep.subr.mxu0 0.0
    %1018 = vmatpush1.msra.mxu0 0.0
    %1019 = vmatprep.subr.mxu0 0.0
    %1020 = vmatpush1.msra.mxu0 0.0
    %1021 = vmatprep.subr.mxu0 0.0
    %1022 = vmatpush1.msra.mxu0 0.0
    %1023 = vmatprep.subr.mxu0 0.0
    %1024 = vmatpush1.msra.mxu0 0.0
    %1025 = vmatprep.subr.mxu0 0.0
    %1026 = vmatpush1.msra.mxu0 0.0
    %1027 = vmatprep.subr.mxu0 0.0
    %1028 = vmatpush1.msra.mxu0 0.0
    %1029 = vmatprep.subr.mxu0 0.0
    %1030 = vmatpush1.msra.mxu0 %v1006
    %1031 = vmatprep.subr.mxu0 0.0
    %1032 = vmatpush1.msra.mxu0 %v1005
    %1033 = vmatprep.subr.mxu0 0.0
    %1034 = vmatpush1.msra.mxu0 %v1004
    %1035 = vmatprep.subr.mxu0 0.0
    %1036 = vmatpush1.msra.mxu0 %v1003
    %1037 = vmatprep.subr.mxu0 0.0
    %1038 = vmatpush1.msra.mxu0 %v1002
    %1039 = vmatprep.subr.mxu0 0.0
    %1040 = vmatpush1.msra.mxu0 %v1001
    %1041 = vmatprep.subr.mxu0 0.0
    %1042 = vmatpush1.msra.mxu0 %v1000
    %1043 = vmatprep.subr.mxu0 0.0
    %1044 = vmatpush1.msra.mxu0 %v999
    %1045 = vmatprep.subr.mxu0 0.0
    %1046 = vmatpush2.msra.mxu0 0.0
    %1047 = vmatprep.subr.mxu0 0.0
    %1048 = vmatpush2.msra.mxu0 0.0
    %1049 = vmatprep.subr.mxu0 0.0
    %1050 = vmatpush2.msra.mxu0 0.0
    %1051 = vmatprep.subr.mxu0 0.0
    %1052 = vmatpush2.msra.mxu0 0.0
    %1053 = vmatprep.subr.mxu0 0.0
    %1054 = vmatpush2.msra.mxu0 0.0
    %1055 = vmatprep.subr.mxu0 0.0
    %1056 = vmatpush2.msra.mxu0 0.0
    %1057 = vmatprep.subr.mxu0 0.0
    %1058 = vmatpush2.msra.mxu0 0.0
    %1059 = vmatprep.subr.mxu0 0.0
    %1060 = vmatpush2.msra.mxu0 0.0
    %1061 = vmatprep.subr.mxu0 0.0
    %1062 = vmatpush2.msra.mxu0 0.0
    %1063 = vmatprep.subr.mxu0 0.0
    %1064 = vmatpush2.msra.mxu0 0.0
    %1065 = vmatprep.subr.mxu0 0.0
    %1066 = vmatpush2.msra.mxu0 0.0
    %1067 = vmatprep.subr.mxu0 0.0
    %1068 = vmatpush2.msra.mxu0 0.0
    %1069 = vmatprep.subr.mxu0 0.0
    %1070 = vmatpush2.msra.mxu0 0.0
    %1071 = vmatprep.subr.mxu0 0.0
    %1072 = vmatpush2.msra.mxu0 0.0
    %1073 = vmatprep.subr.mxu0 0.0
    %1074 = vmatpush2.msra.mxu0 0.0
    %1075 = vmatprep.subr.mxu0 0.0
    %1076 = vmatpush2.msra.mxu0 0.0
    %1077 = vmatprep.mubr.f32.mxu0 0.0
    %1078 = vmatmul.mubr.f32.gmra.mxu0 %v1008
    %v1079 = vpop.f32.mrf.mxu0
    %v1080 = vadd.f32 0.0, %v1079
    %v1081 = vpop.f32.mrf.mxu0
    %1082 = vmatprep.mubr.f32.mxu0 0.0
    %1083 = vmatmul.mubr.f32.gmra.mxu0 %v1011
    %v1084 = vpop.f32.mrf.mxu0
    %v1085 = vadd.f32 0.0, %v1084
    %v1086 = vpop.f32.mrf.mxu0
    %1087 = vdwg.mxu0
    %1088 = vmatprep.subr.mxu0 0.0
    %1089 = vmatpush1.msra.mxu0 0.0
    %1090 = vmatprep.subr.mxu0 0.0
    %1091 = vmatpush1.msra.mxu0 0.0
    %1092 = vmatprep.subr.mxu0 0.0
    %1093 = vmatpush1.msra.mxu0 0.0
    %1094 = vmatprep.subr.mxu0 0.0
    %1095 = vmatpush1.msra.mxu0 0.0
    %1096 = vmatprep.subr.mxu0 0.0
    %1097 = vmatpush1.msra.mxu0 0.0
    %1098 = vmatprep.subr.mxu0 0.0
    %1099 = vmatpush1.msra.mxu0 0.0
    %1100 = vmatprep.subr.mxu0 0.0
    %1101 = vmatpush1.msra.mxu0 0.0
    %1102 = vmatprep.subr.mxu0 0.0
    %1103 = vmatpush1.msra.mxu0 0.0
    %1104 = vmatprep.subr.mxu0 0.0
    %1105 = vmatpush1.msra.mxu0 %v998
    %1106 = vmatprep.subr.mxu0 0.0
    %1107 = vmatpush1.msra.mxu0 %v997
    %1108 = vmatprep.subr.mxu0 0.0
    %1109 = vmatpush1.msra.mxu0 %v996
    %1110 = vmatprep.subr.mxu0 0.0
    %1111 = vmatpush1.msra.mxu0 %v995
    %1112 = vmatprep.subr.mxu0 0.0
    %1113 = vmatpush1.msra.mxu0 %v994
    %1114 = vmatprep.subr.mxu0 0.0
    %1115 = vmatpush1.msra.mxu0 %v993
    %1116 = vmatprep.subr.mxu0 0.0
    %1117 = vmatpush1.msra.mxu0 %v992
    %1118 = vmatprep.subr.mxu0 0.0
    %1119 = vmatpush1.msra.mxu0 %v991
    %1120 = vmatprep.subr.mxu0 0.0
    %1121 = vmatpush2.msra.mxu0 0.0
    %1122 = vmatprep.subr.mxu0 0.0
    %1123 = vmatpush2.msra.mxu0 0.0
    %1124 = vmatprep.subr.mxu0 0.0
    %1125 = vmatpush2.msra.mxu0 0.0
    %1126 = vmatprep.subr.mxu0 0.0
    %1127 = vmatpush2.msra.mxu0 0.0
    %1128 = vmatprep.subr.mxu0 0.0
    %1129 = vmatpush2.msra.mxu0 0.0
    %1130 = vmatprep.subr.mxu0 0.0
    %1131 = vmatpush2.msra.mxu0 0.0
    %1132 = vmatprep.subr.mxu0 0.0
    %1133 = vmatpush2.msra.mxu0 0.0
    %1134 = vmatprep.subr.mxu0 0.0
    %1135 = vmatpush2.msra.mxu0 0.0
    %1136 = vmatprep.subr.mxu0 0.0
    %1137 = vmatpush2.msra.mxu0 0.0
    %1138 = vmatprep.subr.mxu0 0.0
    %1139 = vmatpush2.msra.mxu0 0.0
    %1140 = vmatprep.subr.mxu0 0.0
    %1141 = vmatpush2.msra.mxu0 0.0
    %1142 = vmatprep.subr.mxu0 0.0
    %1143 = vmatpush2.msra.mxu0 0.0
    %1144 = vmatprep.subr.mxu0 0.0
    %1145 = vmatpush2.msra.mxu0 0.0
    %1146 = vmatprep.subr.mxu0 0.0
    %1147 = vmatpush2.msra.mxu0 0.0
    %1148 = vmatprep.subr.mxu0 0.0
    %1149 = vmatpush2.msra.mxu0 0.0
    %1150 = vmatprep.subr.mxu0 0.0
    %1151 = vmatpush2.msra.mxu0 0.0
    %1152 = vmatprep.mubr.f32.mxu0 0.0
    %1153 = vmatmul.mubr.f32.gmra.mxu0 %v327
    %v1154 = vpop.f32.mrf.mxu0
    %v1155 = vadd.f32 %v1080, %v1154
    %v1156 = vpop.f32.mrf.mxu0
    %1157 = vmatprep.mubr.f32.mxu0 0.0
    %1158 = vmatmul.mubr.f32.gmra.mxu0 %v330
    %v1159 = vpop.f32.mrf.mxu0
    %v1160 = vadd.f32 %v1085, %v1159
    %v1161 = vpop.f32.mrf.mxu0
    %1162 = vdwg.mxu0
    %v1163 = vld [vmem:[#allocation10 + $0x80] sm:$0xff]
    %v1164 = vld [vmem:[#allocation10 + $0x88] sm:$0xff]
    %v1165 = vld [vmem:[#allocation10 + $0x90] sm:$0xff]
    %v1166 = vld [vmem:[#allocation10 + $0x98] sm:$0xff]
    %v1167 = vld [vmem:[#allocation10 + $0xa0] sm:$0xff]
    %v1168 = vld [vmem:[#allocation10 + $0xa8] sm:$0xff]
    %v1169 = vld [vmem:[#allocation10 + $0xb0] sm:$0xff]
    %v1170 = vld [vmem:[#allocation10 + $0xb8] sm:$0xff]
    %v1172 = vsel %vm325, %v692, 0
    %v1175 = vsel %vm325, %v697, 0
    %1177 = vmatprep.subr.mxu0 0.0
    %1178 = vmatpush1.msra.mxu0 0.0
    %1179 = vmatprep.subr.mxu0 0.0
    %1180 = vmatpush1.msra.mxu0 0.0
    %1181 = vmatprep.subr.mxu0 0.0
    %1182 = vmatpush1.msra.mxu0 0.0
    %1183 = vmatprep.subr.mxu0 0.0
    %1184 = vmatpush1.msra.mxu0 0.0
    %1185 = vmatprep.subr.mxu0 0.0
    %1186 = vmatpush1.msra.mxu0 0.0
    %1187 = vmatprep.subr.mxu0 0.0
    %1188 = vmatpush1.msra.mxu0 0.0
    %1189 = vmatprep.subr.mxu0 0.0
    %1190 = vmatpush1.msra.mxu0 0.0
    %1191 = vmatprep.subr.mxu0 0.0
    %1192 = vmatpush1.msra.mxu0 0.0
    %1193 = vmatprep.subr.mxu0 0.0
    %1194 = vmatpush1.msra.mxu0 %v1170
    %1195 = vmatprep.subr.mxu0 0.0
    %1196 = vmatpush1.msra.mxu0 %v1169
    %1197 = vmatprep.subr.mxu0 0.0
    %1198 = vmatpush1.msra.mxu0 %v1168
    %1199 = vmatprep.subr.mxu0 0.0
    %1200 = vmatpush1.msra.mxu0 %v1167
    %1201 = vmatprep.subr.mxu0 0.0
    %1202 = vmatpush1.msra.mxu0 %v1166
    %1203 = vmatprep.subr.mxu0 0.0
    %1204 = vmatpush1.msra.mxu0 %v1165
    %1205 = vmatprep.subr.mxu0 0.0
    %1206 = vmatpush1.msra.mxu0 %v1164
    %1207 = vmatprep.subr.mxu0 0.0
    %1208 = vmatpush1.msra.mxu0 %v1163
    %1209 = vmatprep.subr.mxu0 0.0
    %1210 = vmatpush2.msra.mxu0 0.0
    %1211 = vmatprep.subr.mxu0 0.0
    %1212 = vmatpush2.msra.mxu0 0.0
    %1213 = vmatprep.subr.mxu0 0.0
    %1214 = vmatpush2.msra.mxu0 0.0
    %1215 = vmatprep.subr.mxu0 0.0
    %1216 = vmatpush2.msra.mxu0 0.0
    %1217 = vmatprep.subr.mxu0 0.0
    %1218 = vmatpush2.msra.mxu0 0.0
    %1219 = vmatprep.subr.mxu0 0.0
    %1220 = vmatpush2.msra.mxu0 0.0
    %1221 = vmatprep.subr.mxu0 0.0
    %1222 = vmatpush2.msra.mxu0 0.0
    %1223 = vmatprep.subr.mxu0 0.0
    %1224 = vmatpush2.msra.mxu0 0.0
    %1225 = vmatprep.subr.mxu0 0.0
    %1226 = vmatpush2.msra.mxu0 0.0
    %1227 = vmatprep.subr.mxu0 0.0
    %1228 = vmatpush2.msra.mxu0 0.0
    %1229 = vmatprep.subr.mxu0 0.0
    %1230 = vmatpush2.msra.mxu0 0.0
    %1231 = vmatprep.subr.mxu0 0.0
    %1232 = vmatpush2.msra.mxu0 0.0
    %1233 = vmatprep.subr.mxu0 0.0
    %1234 = vmatpush2.msra.mxu0 0.0
    %1235 = vmatprep.subr.mxu0 0.0
    %1236 = vmatpush2.msra.mxu0 0.0
    %1237 = vmatprep.subr.mxu0 0.0
    %1238 = vmatpush2.msra.mxu0 0.0
    %1239 = vmatprep.subr.mxu0 0.0
    %1240 = vmatpush2.msra.mxu0 0.0
    %1241 = vmatprep.mubr.f32.mxu0 0.0
    %1242 = vmatmul.mubr.f32.gmra.mxu0 %v1172
    %v1243 = vpop.f32.mrf.mxu0
    %v1244 = vadd.f32 0.0, %v1243
    %v1245 = vpop.f32.mrf.mxu0
    %1246 = vmatprep.mubr.f32.mxu0 0.0
    %1247 = vmatmul.mubr.f32.gmra.mxu0 %v1175
    %v1248 = vpop.f32.mrf.mxu0
    %v1249 = vadd.f32 0.0, %v1248
    %v1250 = vpop.f32.mrf.mxu0
    %1251 = vdwg.mxu0
    %v1252 = vadd.f32 %v1155, %v1244
    %v1253 = vadd.f32 %v1160, %v1249
    %v1254 = vld [vmem:[#allocation10 + $0xc0] sm:$0x7]
    %vm1255 = vcmask 23552
    %v1257 = vsel %vm1255, %v989, 0
    %v1260 = vsel %vm1255, %v990, 0
    %vm1262 = vcmask 1042432
    %v1264 = vsel %vm1262, %v1254, 0
    %1266 = vmatprep.subr.mxu0 0.0
    %1267 = vmatpush1.msra.mxu0 0.0
    %1268 = vmatprep.subr.mxu0 0.0
    %1269 = vmatpush1.msra.mxu0 0.0
    %1270 = vmatprep.subr.mxu0 0.0
    %1271 = vmatpush1.msra.mxu0 0.0
    %1272 = vmatprep.subr.mxu0 0.0
    %1273 = vmatpush1.msra.mxu0 0.0
    %1274 = vmatprep.subr.mxu0 0.0
    %1275 = vmatpush1.msra.mxu0 0.0
    %1276 = vmatprep.subr.mxu0 0.0
    %1277 = vmatpush1.msra.mxu0 0.0
    %1278 = vmatprep.subr.mxu0 0.0
    %1279 = vmatpush1.msra.mxu0 0.0
    %1280 = vmatprep.subr.mxu0 0.0
    %1281 = vmatpush1.msra.mxu0 0.0
    %1282 = vmatprep.subr.mxu0 0.0
    %1283 = vmatpush1.msra.mxu0 0.0
    %1284 = vmatprep.subr.mxu0 0.0
    %1285 = vmatpush1.msra.mxu0 0.0
    %1286 = vmatprep.subr.mxu0 0.0
    %1287 = vmatpush1.msra.mxu0 0.0
    %1288 = vmatprep.subr.mxu0 0.0
    %1289 = vmatpush1.msra.mxu0 0.0
    %1290 = vmatprep.subr.mxu0 0.0
    %1291 = vmatpush1.msra.mxu0 0.0
    %1292 = vmatprep.subr.mxu0 0.0
    %1293 = vmatpush1.msra.mxu0 0.0
    %1294 = vmatprep.subr.mxu0 0.0
    %1295 = vmatpush1.msra.mxu0 0.0
    %1296 = vmatprep.subr.mxu0 0.0
    %1297 = vmatpush1.msra.mxu0 %v1264
    %1298 = vmatprep.subr.mxu0 0.0
    %1299 = vmatpush2.msra.mxu0 0.0
    %1300 = vmatprep.subr.mxu0 0.0
    %1301 = vmatpush2.msra.mxu0 0.0
    %1302 = vmatprep.subr.mxu0 0.0
    %1303 = vmatpush2.msra.mxu0 0.0
    %1304 = vmatprep.subr.mxu0 0.0
    %1305 = vmatpush2.msra.mxu0 0.0
    %1306 = vmatprep.subr.mxu0 0.0
    %1307 = vmatpush2.msra.mxu0 0.0
    %1308 = vmatprep.subr.mxu0 0.0
    %1309 = vmatpush2.msra.mxu0 0.0
    %1310 = vmatprep.subr.mxu0 0.0
    %1311 = vmatpush2.msra.mxu0 0.0
    %1312 = vmatprep.subr.mxu0 0.0
    %1313 = vmatpush2.msra.mxu0 0.0
    %1314 = vmatprep.subr.mxu0 0.0
    %1315 = vmatpush2.msra.mxu0 0.0
    %1316 = vmatprep.subr.mxu0 0.0
    %1317 = vmatpush2.msra.mxu0 0.0
    %1318 = vmatprep.subr.mxu0 0.0
    %1319 = vmatpush2.msra.mxu0 0.0
    %1320 = vmatprep.subr.mxu0 0.0
    %1321 = vmatpush2.msra.mxu0 0.0
    %1322 = vmatprep.subr.mxu0 0.0
    %1323 = vmatpush2.msra.mxu0 0.0
    %1324 = vmatprep.subr.mxu0 0.0
    %1325 = vmatpush2.msra.mxu0 0.0
    %1326 = vmatprep.subr.mxu0 0.0
    %1327 = vmatpush2.msra.mxu0 0.0
    %1328 = vmatprep.subr.mxu0 0.0
    %1329 = vmatpush2.msra.mxu0 0.0
    %1330 = vmatprep.mubr.f32.mxu0 0.0
    %1331 = vmatmul.mubr.f32.gmra.mxu0 %v1257
    %v1332 = vpop.f32.mrf.mxu0
    %v1333 = vadd.f32 0.0, %v1332
    %v1334 = vpop.f32.mrf.mxu0
    %1335 = vmatprep.mubr.f32.mxu0 0.0
    %1336 = vmatmul.mubr.f32.gmra.mxu0 %v1260
    %v1337 = vpop.f32.mrf.mxu0
    %v1338 = vadd.f32 0.0, %v1337
    %v1339 = vpop.f32.mrf.mxu0
    %1340 = vdwg.mxu0
    %v1341 = vadd.f32 %v1252, %v1333
    %v1342 = vadd.f32 %v1253, %v1338
    %v1343 = vld [vmem:[#allocation11] sm:$0x1]
    %v1345 = vlaneseq
    %v1346 = vshrl.u32 %v1345, 7
    %v1347 = vsub.s32 0, %v1346
    %v1348 = vrot.slane %v1343, %v1347
    %v1350 = vadd.f32 %v1341, %v1348
    %v1351 = vadd.f32 %v1342, %v1348
    %v1352 = vmax.f32 %v1350, 0.0
    %v1353 = vmax.f32 %v1351, 0.0
    %v1354 = vld [vmem:[#allocation13] sm:$0x1]
    %v1356 = vlaneseq
    %v1357 = vshrl.u32 %v1356, 7
    %v1358 = vsub.s32 0, %v1357
    %v1359 = vrot.slane %v1354, %v1358
    %v1361 = vmul.f32 %v1352, %v1359
    %v1362 = vmul.f32 %v1353, %v1359
    %1363 = vadd.xlane.f32.xlu0 %v1361
    %v1364 = vpop.xlane.xlu0 %1363
    %1365 = vadd.xlane.f32.xlu0 %v1362
    %v1366 = vpop.xlane.xlu0 %1365
    %v1367 = vld [vmem:[#allocation2] sm:$0x1]
    %v1369 = vlaneseq
    %v1370 = vshrl.u32 %v1369, 7
    %v1371 = vsub.s32 0, %v1370
    %v1372 = vrot.slane %v1367, %v1371
    %v1374 = vadd.f32 %v1364, %v1372
    %v1375 = vadd.f32 %v1366, %v1372
    %v1376 = vld [vmem:[%s14] sm:$0xff]
    %v1377 = vld [vmem:[%s14 + $0x8] sm:$0xff]
    %v1378 = vsub.f32 %v1374, %v1376
    %v1379 = vsub.f32 %v1375, %v1377
    %v1380 = vmul.f32 %v1378, %v1378
    %v1381 = vmul.f32 %v1379, %v1379
    %vm1382 = vcmask 7168
    %v1383 = vsel %vm1382, %v1380, 0.0
    %v1384 = vsel %vm1382, %v1381, 0.0
    %v1385 = vadd.f32 %v1383, %v1384
    %1386 = vadd.xlane.f32.xlu0 %v1385
    %v1387 = vpop.xlane.xlu0 %1386
    %v1388 = vrot.slane %v1387, 4
    %v1389 = vadd.f32 %v1387, %v1388
    %v1390 = vrot.slane %v1389, 2
    %v1391 = vadd.f32 %v1389, %v1390
    %v1392 = vrot.slane %v1391, 1
    %v1393 = vadd.f32 %v1391, %v1392
    %s1394 = vtos %v1393
    %s1395 = smul.f32 %s1394, 0.0625
    %vm1396 = vcmp.eq.s32.totalorder %v144, 0
    %vm1397 = vcmp.eq.s32.totalorder %v144, 1
    %vm1398 = vcmp.eq.s32.totalorder %v144, 2
    %v1399 = vstv %s519
    %v1400 = vstv %s1395
    %v1401 = vsel %vm1398, %v1399, %v1400
    %v1402 = vstv %s488
    %v1403 = vsel %vm1397, %v1402, %v1401
    %v1404 = vstv %s467
    %v1405 = vsel %vm1396, %v1404, %v1403
    %vm1406 = vcmask 24576
    %1407 = vst.msk [vmem:[%s17] sm:$0x1] %vm1406, %v1405
    // Predicated region
    $region98: #{pegb_forward.1} parent=1 // pred_check
      _
    $region99: #{pegb_forward.1} parent=1 // pred_check_branch
      %1409 = sbr.rel (0) target = $region101
    $region100: #{pegb_forward.1} parent=1 // pred_region
      _
    $region101: #{pegb_forward.1} parent=1 // pred_fallthru
      _
    // Predicated region
    $region102: #{pegb_forward.1} parent=1 // pred_check
      _
    $region103: #{pegb_forward.1} parent=1 // pred_check_branch
      %1411 = sbr.rel (0) target = $region105
    $region104: #{pegb_forward.1} parent=1 // pred_region
      _
    $region105: #{pegb_forward.1} parent=1 // pred_fallthru
      _
    %1412 = vsyncpa [#allocation4], 1
    %1413 = vsyncpa [#allocation6], 1
    %1414 = vsyncpa [#allocation9], 1
    %1415 = vsyncpa [#allocation12], 1

</llo_original>
